<compile_context>
chip_gen: v7x
topology: tpu7x:2x2x1
jax: 0.10.0
libtpu: 0.0.40
codegen_flags: <defaults>
</compile_context>

<pallas_src>
import numpy as np
import jax
import jax.numpy as jnp
from jax import lax
from jax.experimental import pallas as pl
from jax.experimental.pallas import tpu as pltpu

# --- static configuration ----------------------------------------------------
B, C_IN, H, W = 2, 4, 16, 16      # input x: (B, C_IN, H, W), NCHW like PyTorch
C_FEAT = 32                       # pretrain_model.fc.in_features (feature dim)
HIDDEN = 32                       # hidden_units
OUT = 8                           # output_units
DROPOUT = 0.5                     # hidden_dropout (identity in eval mode)

N = H * W                         # spatial positions per image (256)
HP, WP = H + 2, W + 2             # padded spatial dims for SAME 3x3 conv (18,18)
LX = HP * WP                      # flattened padded image length (324)
Q_IMG = (H - 1) * WP + W          # contiguous output span inside one image (286)
QT = (B - 1) * LX + Q_IMG         # real flattened output positions (610)
QT_PAD = 640                      # lane-padded output positions (multiple of 128)
XW = 768                          # lane-padded flattened input width
K_STACK = 9 * 8                   # stacked conv contraction dim (8 rows per tap)
ONES_ROW = 4                      # scratch row holding the constant 1.0 feature
C_FEAT_E = C_FEAT + 1             # feature rows + "ones" flag row (33)
HIDDEN_E = HIDDEN + 1             # hidden cols + "ones" flag col (33)
SLAB = 128                        # lane-dense output slab width
ROWS = 8                          # sublane-padded batch rows in the slab

# packed-parameter row offsets (all multiples of 8 -> aligned sublane reads)
WC_ROW0, WHN_ROW0, WS_ROW0, P_ROWS = 0, 40, 80, 120
MAX_SHIFT = 2 * WP + 2            # largest 3x3 tap lane shift (38)

# --- static layout asserts (fragility guard from the review) -----------------
assert QT == (B - 1) * LX + Q_IMG and QT <= QT_PAD and QT_PAD % 128 == 0
assert B * LX <= XW and MAX_SHIFT + QT_PAD <= XW and XW % 128 == 0
assert C_IN <= ONES_ROW < 8 and K_STACK == 9 * 8
assert C_FEAT_E <= WHN_ROW0 - WC_ROW0 and C_FEAT_E <= WS_ROW0 - WHN_ROW0
assert WS_ROW0 + HIDDEN_E <= P_ROWS and P_ROWS % 8 == 0
assert HIDDEN + OUT <= SLAB and B <= ROWS and HIDDEN_E <= SLAB and K_STACK <= SLAB


def resnet_head_kernel(x_ref, params_ref, poolT_ref, slab_ref, stg_ref):
    """Whole forward for all B images: one staged operand, four MXU dots."""
    # ---- stage the 3x3 conv operand: (K_STACK, QT_PAD), 8 rows per tap ------
    stg_ref[...] = jnp.zeros((K_STACK, QT_PAD), jnp.float32)
    stg_ref[ONES_ROW:ONES_ROW + 1, :] = jnp.ones((1, QT_PAD), jnp.float32)
    for tap in range(9):                         # static, unrolled
        dy, dx = divmod(tap, 3)
        s = dy * WP + dx                         # static lane shift
        stg_ref[8 * tap:8 * tap + C_IN, :] = x_ref[:, s:s + QT_PAD]

    # ---- conv + bias + ReLU: single (33,72)x(72,640) MXU dot ----------------
    wc = params_ref[WC_ROW0:WC_ROW0 + C_FEAT_E, 0:K_STACK]       # (33, 72)
    feat = jnp.maximum(
        jnp.dot(wc, stg_ref[...], preferred_element_type=jnp.float32), 0.0)
    # feat: (33, 640); row 32 == 1.0 everywhere (the bias/ones feature).

    # ---- AdaptiveAvgPool2d((1,1)) + flatten: dot against (640, 8) mask ------
    # poolT zeroes padded-border / cross-image / lane-pad garbage columns and
    # averages the valid N positions of each image; no transpose of feat.
    pooledT = jnp.dot(feat, poolT_ref[...], preferred_element_type=jnp.float32)
    pooled = pooledT.T                                            # tiny (8, 33)

    # ---- hidden = ReLU(-(Linear(pooled))); negation & bias folded in whn ----
    whn = params_ref[WHN_ROW0:WHN_ROW0 + C_FEAT_E, 0:HIDDEN_E]    # (33, 33)
    hid = jnp.maximum(
        jnp.dot(pooled, whn, preferred_element_type=jnp.float32), 0.0)  # (8, 33)

    # ---- Dropout: identity (eval).  Output layer fused with slab packing ----
    # ws = [[I | W_out^T | 0], [0 | b_out | 0]] -> lanes 0..31 = hid,
    # lanes 32..39 = output_layer(hid); one unmasked full-tile store.
    ws = params_ref[WS_ROW0:WS_ROW0 + HIDDEN_E, :]                # (33, 128)
    slab_ref[...] = jnp.dot(hid, ws, preferred_element_type=jnp.float32)


def init_params(key):
    """Deterministic synthetic parameters in PyTorch layouts."""
    ks = jax.random.split(key, 6)
    w_conv = jax.random.normal(ks[0], (C_FEAT, C_IN, 3, 3), jnp.float32) * 0.1
    b_conv = jax.random.normal(ks[1], (C_FEAT,), jnp.float32) * 0.1
    w_hid = jax.random.normal(ks[2], (HIDDEN, C_FEAT), jnp.float32) * 0.1   # (out, in)
    b_hid = jax.random.normal(ks[3], (HIDDEN,), jnp.float32) * 0.1
    w_out = jax.random.normal(ks[4], (OUT, HIDDEN), jnp.float32) * 0.1      # (out, in)
    b_out = jax.random.normal(ks[5], (OUT,), jnp.float32) * 0.1
    return w_conv, b_conv, w_hid, b_hid, w_out, b_out


def to_kernel_params(params):
    """PyTorch layouts -> one packed (P_ROWS, 128) kernel parameter array."""
    w_conv, b_conv, w_hid, b_hid, w_out, b_out = [np.asarray(p) for p in params]

    # conv weights: tap t = dy*3+dx occupies K positions 8t..8t+3; K position
    # ONES_ROW multiplies the constant-1 scratch row -> conv bias; output row
    # C_FEAT is the synthetic "ones" feature (weight 1 on the ones row).
    wc = np.zeros((C_FEAT_E, K_STACK), np.float32)
    for t in range(9):
        dy, dx = divmod(t, 3)
        wc[:C_FEAT, 8 * t:8 * t + C_IN] = w_conv[:, :, dy, dx]
    wc[:C_FEAT, ONES_ROW] = b_conv
    wc[C_FEAT, ONES_ROW] = 1.0

    # hidden layer with negation + bias folded; col HIDDEN propagates the flag.
    whn = np.zeros((C_FEAT_E, HIDDEN_E), np.float32)
    whn[:C_FEAT, :HIDDEN] = -w_hid.T
    whn[C_FEAT, :HIDDEN] = -b_hid
    whn[C_FEAT, HIDDEN] = 1.0

    # fused output layer + slab packing: [I | W_out^T | 0] with bias row.
    ws = np.zeros((HIDDEN_E, SLAB), np.float32)
    ws[:HIDDEN, :HIDDEN] = np.eye(HIDDEN, dtype=np.float32)
    ws[:HIDDEN, HIDDEN:HIDDEN + OUT] = w_out.T
    ws[HIDDEN, HIDDEN:HIDDEN + OUT] = b_out

    packed = np.zeros((P_ROWS, SLAB), np.float32)
    packed[WC_ROW0:WC_ROW0 + C_FEAT_E, :K_STACK] = wc
    packed[WHN_ROW0:WHN_ROW0 + C_FEAT_E, :HIDDEN_E] = whn
    packed[WS_ROW0:WS_ROW0 + HIDDEN_E, :] = ws
    return jnp.asarray(packed)


def make_poolT():
    """(QT_PAD, ROWS) mask: 1/N at valid interior positions of image b, else 0."""
    pm = np.zeros((QT_PAD, ROWS), np.float32)
    for b in range(B):
        for h in range(H):
            base = b * LX + h * WP
            pm[base:base + W, b] = 1.0 / N
    return jnp.asarray(pm)


@jax.jit
def _forward_slab(x_nchw, params_packed, poolT):
    # Minimal wrapper glue (one XLA fusion): channel-first + pad + flatten + lane pad.
    xcf = jnp.transpose(x_nchw, (1, 0, 2, 3))                 # (C_IN, B, H, W)
    xpad = jnp.pad(xcf, ((0, 0), (0, 0), (1, 1), (1, 1)))     # (C_IN, B, HP, WP)
    xflat = xpad.reshape(C_IN, B * LX)                        # (C_IN, 648)
    xflat = jnp.pad(xflat, ((0, 0), (0, XW - B * LX)))        # (C_IN, 768)

    vmem = pl.BlockSpec(memory_space=pltpu.MemorySpace.VMEM)
    return pl.pallas_call(
        resnet_head_kernel,
        out_shape=jax.ShapeDtypeStruct((ROWS, SLAB), jnp.float32),
        in_specs=[vmem, vmem, vmem],
        out_specs=vmem,
        scratch_shapes=[pltpu.VMEM((K_STACK, QT_PAD), jnp.float32)],
    )(xflat, params_packed, poolT)


def resnet_model_forward(x_nchw, params_packed, poolT):
    """Returns (outputs, hidden) like the PyTorch module's forward."""
    slab = _forward_slab(x_nchw, params_packed, poolT)
    return slab[:B, HIDDEN:HIDDEN + OUT], slab[:B, :HIDDEN]


def reference(x_nchw, params):
    """Pure-JAX reference mirroring the PyTorch forward (NCHW semantics)."""
    w_conv, b_conv, w_hid, b_hid, w_out, b_out = params
    feat = lax.conv_general_dilated(
        x_nchw, w_conv, window_strides=(1, 1), padding="SAME",
        dimension_numbers=("NCHW", "OIHW", "NCHW"))
    feat = jnp.maximum(feat + b_conv[None, :, None, None], 0.0)
    pooled = jnp.mean(feat, axis=(2, 3))                    # (B, C_FEAT)
    hid = jnp.maximum(-(pooled @ w_hid.T + b_hid), 0.0)     # (B, HIDDEN)
    out = hid @ w_out.T + b_out                             # (B, OUT)
    return out, hid


if __name__ == "__main__":
    key = jax.random.PRNGKey(0)
    kx, kp = jax.random.split(key)
    x = jax.random.normal(kx, (B, C_IN, H, W), jnp.float32)

    params = init_params(kp)
    params_packed = to_kernel_params(params)
    poolT = make_poolT()

    out, hid = resnet_model_forward(x, params_packed, poolT)
    out = jax.block_until_ready(out)
    hid = jax.block_until_ready(hid)

    ref_out, ref_hid = reference(x, params)
    assert out.shape == (B, OUT) and hid.shape == (B, HIDDEN)
    assert jnp.allclose(out, ref_out, atol=1e-4, rtol=1e-4)
    assert jnp.allclose(hid, ref_hid, atol=1e-4, rtol=1e-4)

    print("KERNEL_OK")
</pallas_src>

<mosaic_0001>
module attributes {stable_mosaic.version = 11 : i64} {
  func.func @resnet_head_kernel(%arg0: memref<4x768xf32, #tpu.memory_space<vmem>>, %arg1: memref<120x128xf32, #tpu.memory_space<vmem>>, %arg2: memref<640x8xf32, #tpu.memory_space<vmem>>, %arg3: memref<8x128xf32, #tpu.memory_space<vmem>>, %arg4: memref<72x640xf32, #tpu.memory_space<vmem>>) attributes {dimension_semantics = [], scalar_prefetch = 0 : i64, scratch_operands = 1 : i64, tpu.core_type = #tpu.core_type<tc>} {
    %cst = arith.constant 0.000000e+00 : f32
    %0 = vector.broadcast %cst : f32 to vector<72x640xf32>
    %c0 = arith.constant 0 : index
    %c0_0 = arith.constant 0 : index
    %1 = vector.load %arg4[%c0, %c0_0] : memref<72x640xf32, #tpu.memory_space<vmem>>, vector<72x640xf32>
    tpu.vector_store %arg4[%c0, %c0_0], %0 {strides = array<i32>} : memref<72x640xf32, #tpu.memory_space<vmem>>, vector<72x640xf32>,
    %cst_1 = arith.constant 1.000000e+00 : f32
    %2 = vector.broadcast %cst_1 : f32 to vector<1x640xf32>
    %c4 = arith.constant 4 : index
    %c0_2 = arith.constant 0 : index
    %3 = vector.load %arg4[%c4, %c0_2] : memref<72x640xf32, #tpu.memory_space<vmem>>, vector<1x640xf32>
    tpu.vector_store %arg4[%c4, %c0_2], %2 {strides = array<i32>} : memref<72x640xf32, #tpu.memory_space<vmem>>, vector<1x640xf32>,
    %c0_3 = arith.constant 0 : index
    %c0_4 = arith.constant 0 : index
    %4 = vector.load %arg0[%c0_3, %c0_4] : memref<4x768xf32, #tpu.memory_space<vmem>>, vector<4x640xf32>
    %c0_5 = arith.constant 0 : index
    %c0_6 = arith.constant 0 : index
    %5 = vector.load %arg4[%c0_5, %c0_6] : memref<72x640xf32, #tpu.memory_space<vmem>>, vector<4x640xf32>
    tpu.vector_store %arg4[%c0_5, %c0_6], %4 {strides = array<i32>} : memref<72x640xf32, #tpu.memory_space<vmem>>, vector<4x640xf32>,
    %c0_7 = arith.constant 0 : index
    %c1 = arith.constant 1 : index
    %6 = vector.load %arg0[%c0_7, %c1] : memref<4x768xf32, #tpu.memory_space<vmem>>, vector<4x640xf32>
    %c8 = arith.constant 8 : index
    %c0_8 = arith.constant 0 : index
    %7 = vector.load %arg4[%c8, %c0_8] : memref<72x640xf32, #tpu.memory_space<vmem>>, vector<4x640xf32>
    tpu.vector_store %arg4[%c8, %c0_8], %6 {strides = array<i32>} : memref<72x640xf32, #tpu.memory_space<vmem>>, vector<4x640xf32>,
    %c0_9 = arith.constant 0 : index
    %c2 = arith.constant 2 : index
    %8 = vector.load %arg0[%c0_9, %c2] : memref<4x768xf32, #tpu.memory_space<vmem>>, vector<4x640xf32>
    %c16 = arith.constant 16 : index
    %c0_10 = arith.constant 0 : index
    %9 = vector.load %arg4[%c16, %c0_10] : memref<72x640xf32, #tpu.memory_space<vmem>>, vector<4x640xf32>
    tpu.vector_store %arg4[%c16, %c0_10], %8 {strides = array<i32>} : memref<72x640xf32, #tpu.memory_space<vmem>>, vector<4x640xf32>,
    %c0_11 = arith.constant 0 : index
    %c18 = arith.constant 18 : index
    %10 = vector.load %arg0[%c0_11, %c18] : memref<4x768xf32, #tpu.memory_space<vmem>>, vector<4x640xf32>
    %c24 = arith.constant 24 : index
    %c0_12 = arith.constant 0 : index
    %11 = vector.load %arg4[%c24, %c0_12] : memref<72x640xf32, #tpu.memory_space<vmem>>, vector<4x640xf32>
    tpu.vector_store %arg4[%c24, %c0_12], %10 {strides = array<i32>} : memref<72x640xf32, #tpu.memory_space<vmem>>, vector<4x640xf32>,
    %c0_13 = arith.constant 0 : index
    %c19 = arith.constant 19 : index
    %12 = vector.load %arg0[%c0_13, %c19] : memref<4x768xf32, #tpu.memory_space<vmem>>, vector<4x640xf32>
    %c32 = arith.constant 32 : index
    %c0_14 = arith.constant 0 : index
    %13 = vector.load %arg4[%c32, %c0_14] : memref<72x640xf32, #tpu.memory_space<vmem>>, vector<4x640xf32>
    tpu.vector_store %arg4[%c32, %c0_14], %12 {strides = array<i32>} : memref<72x640xf32, #tpu.memory_space<vmem>>, vector<4x640xf32>,
    %c0_15 = arith.constant 0 : index
    %c20 = arith.constant 20 : index
    %14 = vector.load %arg0[%c0_15, %c20] : memref<4x768xf32, #tpu.memory_space<vmem>>, vector<4x640xf32>
    %c40 = arith.constant 40 : index
    %c0_16 = arith.constant 0 : index
    %15 = vector.load %arg4[%c40, %c0_16] : memref<72x640xf32, #tpu.memory_space<vmem>>, vector<4x640xf32>
    tpu.vector_store %arg4[%c40, %c0_16], %14 {strides = array<i32>} : memref<72x640xf32, #tpu.memory_space<vmem>>, vector<4x640xf32>,
    %c0_17 = arith.constant 0 : index
    %c36 = arith.constant 36 : index
    %16 = vector.load %arg0[%c0_17, %c36] : memref<4x768xf32, #tpu.memory_space<vmem>>, vector<4x640xf32>
    %c48 = arith.constant 48 : index
    %c0_18 = arith.constant 0 : index
    %17 = vector.load %arg4[%c48, %c0_18] : memref<72x640xf32, #tpu.memory_space<vmem>>, vector<4x640xf32>
    tpu.vector_store %arg4[%c48, %c0_18], %16 {strides = array<i32>} : memref<72x640xf32, #tpu.memory_space<vmem>>, vector<4x640xf32>,
    %c0_19 = arith.constant 0 : index
    %c37 = arith.constant 37 : index
    %18 = vector.load %arg0[%c0_19, %c37] : memref<4x768xf32, #tpu.memory_space<vmem>>, vector<4x640xf32>
    %c56 = arith.constant 56 : index
    %c0_20 = arith.constant 0 : index
    %19 = vector.load %arg4[%c56, %c0_20] : memref<72x640xf32, #tpu.memory_space<vmem>>, vector<4x640xf32>
    tpu.vector_store %arg4[%c56, %c0_20], %18 {strides = array<i32>} : memref<72x640xf32, #tpu.memory_space<vmem>>, vector<4x640xf32>,
    %c0_21 = arith.constant 0 : index
    %c38 = arith.constant 38 : index
    %20 = vector.load %arg0[%c0_21, %c38] : memref<4x768xf32, #tpu.memory_space<vmem>>, vector<4x640xf32>
    %c64 = arith.constant 64 : index
    %c0_22 = arith.constant 0 : index
    %21 = vector.load %arg4[%c64, %c0_22] : memref<72x640xf32, #tpu.memory_space<vmem>>, vector<4x640xf32>
    tpu.vector_store %arg4[%c64, %c0_22], %20 {strides = array<i32>} : memref<72x640xf32, #tpu.memory_space<vmem>>, vector<4x640xf32>,
    %c0_23 = arith.constant 0 : index
    %c0_24 = arith.constant 0 : index
    %22 = vector.load %arg1[%c0_23, %c0_24] : memref<120x128xf32, #tpu.memory_space<vmem>>, vector<33x72xf32>
    %c0_25 = arith.constant 0 : index
    %c0_26 = arith.constant 0 : index
    %23 = vector.load %arg4[%c0_25, %c0_26] : memref<72x640xf32, #tpu.memory_space<vmem>>, vector<72x640xf32>
    %cst_27 = arith.constant dense<0.000000e+00> : vector<33x640xf32>
    %24 = tpu.matmul %22, %23, %cst_27 {dimension_numbers = #tpu.dot_dimension_numbers<[1], [0], [0], [1], [0, 0, 1, 1], [], []>} : vector<33x72xf32>, vector<72x640xf32>, vector<33x640xf32> -> vector<33x640xf32>
    %cst_28 = arith.constant 0.000000e+00 : f32
    %25 = vector.broadcast %cst_28 : f32 to vector<33x640xf32>
    %26 = arith.maximumf %24, %25 : vector<33x640xf32>
    %c0_29 = arith.constant 0 : index
    %c0_30 = arith.constant 0 : index
    %27 = vector.load %arg2[%c0_29, %c0_30] : memref<640x8xf32, #tpu.memory_space<vmem>>, vector<640x8xf32>
    %cst_31 = arith.constant dense<0.000000e+00> : vector<33x8xf32>
    %28 = tpu.matmul %26, %27, %cst_31 {dimension_numbers = #tpu.dot_dimension_numbers<[1], [0], [0], [1], [0, 0, 1, 1], [], []>} : vector<33x640xf32>, vector<640x8xf32>, vector<33x8xf32> -> vector<33x8xf32>
    %29 = tpu.transpose %28, [1, 0] : vector<33x8xf32> -> vector<8x33xf32>
    %c40_32 = arith.constant 40 : index
    %c0_33 = arith.constant 0 : index
    %30 = vector.load %arg1[%c40_32, %c0_33] : memref<120x128xf32, #tpu.memory_space<vmem>>, vector<33x33xf32>
    %cst_34 = arith.constant dense<0.000000e+00> : vector<8x33xf32>
    %31 = tpu.matmul %29, %30, %cst_34 {dimension_numbers = #tpu.dot_dimension_numbers<[1], [0], [0], [1], [0, 0, 1, 1], [], []>} : vector<8x33xf32>, vector<33x33xf32>, vector<8x33xf32> -> vector<8x33xf32>
    %cst_35 = arith.constant 0.000000e+00 : f32
    %32 = vector.broadcast %cst_35 : f32 to vector<8x33xf32>
    %33 = arith.maximumf %31, %32 : vector<8x33xf32>
    %c80 = arith.constant 80 : index
    %c0_36 = arith.constant 0 : index
    %34 = vector.load %arg1[%c80, %c0_36] : memref<120x128xf32, #tpu.memory_space<vmem>>, vector<33x128xf32>
    %cst_37 = arith.constant dense<0.000000e+00> : vector<8x128xf32>
    %35 = tpu.matmul %33, %34, %cst_37 {dimension_numbers = #tpu.dot_dimension_numbers<[1], [0], [0], [1], [0, 0, 1, 1], [], []>} : vector<8x33xf32>, vector<33x128xf32>, vector<8x128xf32> -> vector<8x128xf32>
    %c0_38 = arith.constant 0 : index
    %c0_39 = arith.constant 0 : index
    %36 = vector.load %arg3[%c0_38, %c0_39] : memref<8x128xf32, #tpu.memory_space<vmem>>, vector<8x128xf32>
    tpu.vector_store %arg3[%c0_38, %c0_39], %35 {strides = array<i32>} : memref<8x128xf32, #tpu.memory_space<vmem>>, vector<8x128xf32>,
    return
  }
}

</mosaic_0001>

<llo_original>
// kernel: _forward_slab.1
$region0: #{_forward_slab.1}
  #allocation0 [shape = 'u32[]', space=smem, size = 0x4, offset = 0x4, fixed_abs, tag = 'smem constant byte address 0x4 - core index']
  #allocation1 [shape = 'u32[144,128]{1,0:T(1,128)}', space=vmem, size = 0x12000, scoped, tag = 'internal scratch']
  #allocation2 [shape = 'f32[72,640]{1,0:T(8,128)}', space=vmem, size = 0x2d000, scoped, tag = 'scratch operand']
  %s0 = inlined_call_operand.vmem [shape: f32[4,768], index: 0, kind: input, shape index: {}]
  %s1 = inlined_call_operand.vmem [shape: f32[120,128], index: 1, kind: input, shape index: {}]
  %s2 = inlined_call_operand.vmem [shape: f32[640,8], index: 2, kind: input, shape index: {}]
  %s3 = inlined_call_operand.hbm [shape: f32[8,128], index: 3, kind: output, shape index: {}]
  %s4 = sld [smem:[#allocation0]]
  $region22: #{_forward_slab.1} parent=0
    _
  %s6 = ssub.s32 1, %s4
  %s7 = scalar_select 0, %s6, %s4
  $region1: #{_forward_slab.1} parent=0
    #allocation3 [shape = 'u8[4096]{0}', space=vmem, size = 0x1000, scoped, tag = 'output window, operand 0, single buffered']
    #allocation4 [shape = 's32[1]{0}', space=sflag, size = 0x4, scoped, tag = 'scoped memory for _forward_slab.1']
    %8 = vsyncpa [#allocation4], 0
    // Predicated region
    $region2: #{_forward_slab.1} parent=1 // pred_check
      _
    $region3: #{_forward_slab.1} parent=1 // pred_check_branch
      %10 = sbr.rel (0) target = $region5
    $region4: #{_forward_slab.1} parent=1 // pred_region
      _
    $region5: #{_forward_slab.1} parent=1 // pred_fallthru
      _
    // Predicated region
    $region6: #{_forward_slab.1} parent=1 // pred_check
      _
    $region7: #{_forward_slab.1} parent=1 // pred_check_branch
      %12 = sbr.rel (0) target = $region9
    $region8: #{_forward_slab.1} parent=1 // pred_region
      _
    $region9: #{_forward_slab.1} parent=1 // pred_fallthru
      _
    // Predicated region
    $region10: #{_forward_slab.1} parent=1 // pred_check
      _
    $region11: #{_forward_slab.1} parent=1 // pred_check_branch
      %14 = sbr.rel (0) target = $region13
    $region12: #{_forward_slab.1} parent=1 // pred_region
      _
    $region13: #{_forward_slab.1} parent=1 // pred_fallthru
      _
    %15 = vst [vmem:[#allocation2] sm:$0xff] 0.0
    %16 = vst [vmem:[#allocation2 + $0x8] sm:$0xff] 0.0
    %17 = vst [vmem:[#allocation2 + $0x10] sm:$0xff] 0.0
    %18 = vst [vmem:[#allocation2 + $0x18] sm:$0xff] 0.0
    %19 = vst [vmem:[#allocation2 + $0x20] sm:$0xff] 0.0
    %20 = vst [vmem:[#allocation2 + $0x28] sm:$0xff] 0.0
    %21 = vst [vmem:[#allocation2 + $0x30] sm:$0xff] 0.0
    %22 = vst [vmem:[#allocation2 + $0x38] sm:$0xff] 0.0
    %23 = vst [vmem:[#allocation2 + $0x40] sm:$0xff] 0.0
    %24 = vst [vmem:[#allocation2 + $0x48] sm:$0xff] 0.0
    %25 = vst [vmem:[#allocation2 + $0x50] sm:$0xff] 0.0
    %26 = vst [vmem:[#allocation2 + $0x58] sm:$0xff] 0.0
    %27 = vst [vmem:[#allocation2 + $0x60] sm:$0xff] 0.0
    %28 = vst [vmem:[#allocation2 + $0x68] sm:$0xff] 0.0
    %29 = vst [vmem:[#allocation2 + $0x70] sm:$0xff] 0.0
    %30 = vst [vmem:[#allocation2 + $0x78] sm:$0xff] 0.0
    %31 = vst [vmem:[#allocation2 + $0x80] sm:$0xff] 0.0
    %32 = vst [vmem:[#allocation2 + $0x88] sm:$0xff] 0.0
    %33 = vst [vmem:[#allocation2 + $0x90] sm:$0xff] 0.0
    %34 = vst [vmem:[#allocation2 + $0x98] sm:$0xff] 0.0
    %35 = vst [vmem:[#allocation2 + $0xa0] sm:$0xff] 0.0
    %36 = vst [vmem:[#allocation2 + $0xa8] sm:$0xff] 0.0
    %37 = vst [vmem:[#allocation2 + $0xb0] sm:$0xff] 0.0
    %38 = vst [vmem:[#allocation2 + $0xb8] sm:$0xff] 0.0
    %39 = vst [vmem:[#allocation2 + $0xc0] sm:$0xff] 0.0
    %40 = vst [vmem:[#allocation2 + $0xc8] sm:$0xff] 0.0
    %41 = vst [vmem:[#allocation2 + $0xd0] sm:$0xff] 0.0
    %42 = vst [vmem:[#allocation2 + $0xd8] sm:$0xff] 0.0
    %43 = vst [vmem:[#allocation2 + $0xe0] sm:$0xff] 0.0
    %44 = vst [vmem:[#allocation2 + $0xe8] sm:$0xff] 0.0
    %45 = vst [vmem:[#allocation2 + $0xf0] sm:$0xff] 0.0
    %46 = vst [vmem:[#allocation2 + $0xf8] sm:$0xff] 0.0
    %47 = vst [vmem:[#allocation2 + $0x100] sm:$0xff] 0.0
    %48 = vst [vmem:[#allocation2 + $0x108] sm:$0xff] 0.0
    %49 = vst [vmem:[#allocation2 + $0x110] sm:$0xff] 0.0
    %50 = vst [vmem:[#allocation2 + $0x118] sm:$0xff] 0.0
    %51 = vst [vmem:[#allocation2 + $0x120] sm:$0xff] 0.0
    %52 = vst [vmem:[#allocation2 + $0x128] sm:$0xff] 0.0
    %53 = vst [vmem:[#allocation2 + $0x130] sm:$0xff] 0.0
    %54 = vst [vmem:[#allocation2 + $0x138] sm:$0xff] 0.0
    %55 = vst [vmem:[#allocation2 + $0x140] sm:$0xff] 0.0
    %56 = vst [vmem:[#allocation2 + $0x148] sm:$0xff] 0.0
    %57 = vst [vmem:[#allocation2 + $0x150] sm:$0xff] 0.0
    %58 = vst [vmem:[#allocation2 + $0x158] sm:$0xff] 0.0
    %59 = vst [vmem:[#allocation2 + $0x160] sm:$0xff] 0.0
    %v60 = vlaneseq
    %vm61 = vcmp.ge.s32.totalorder %v60, 0
    %vm62 = vcmp.lt.s32.totalorder %v60, 640
    %vm63 = vmand %vm61, %vm62
    %s64 = scalar_lea.vmem [#allocation2], 4
    %65 = vst.msk [vmem:[%s64] ss:$8 sm:$0xf] %vm63, 1.0
    %66 = vst.msk [vmem:[%s64] ss:$8 sm:$0x10] %vm63, 1.0
    %v67 = vld [vmem:[%s0] sm:$0xff]
    %v68 = vld [vmem:[%s0 + $0x8] sm:$0xff]
    %v69 = vld [vmem:[%s0 + $0x10] sm:$0xf]
    %v72 = vcombine.high %v67, %v67
    %v73 = vcombine.high %v68, %v68
    %76 = vst [vmem:[#allocation2] sm:$0xf] %v67
    %77 = vst [vmem:[#allocation2 + $0x8] sm:$0xf] %v72
    %78 = vst [vmem:[#allocation2 + $0x10] sm:$0xf] %v68
    %79 = vst [vmem:[#allocation2 + $0x18] sm:$0xf] %v73
    %80 = vst [vmem:[#allocation2 + $0x20] sm:$0xf] %v69
    %v81 = vld [vmem:[%s0] sm:$0xff]
    %v82 = vld [vmem:[%s0 + $0x8] sm:$0xff]
    %v83 = vld [vmem:[%s0 + $0x10] sm:$0xff]
    %v87 = vcombine.high %v81, %v81
    %v88 = vcombine.high %v82, %v82
    %v89 = vcombine.high %v83, %v83
    %90 = vrot.lane.b32.xlu0 %v81, 127
    %v91 = vpop.permute.xlu0 %90
    %92 = vrot.lane.b32.xlu0 %v87, 127
    %v93 = vpop.permute.xlu0 %92
    %94 = vrot.lane.b32.xlu0 %v82, 127
    %v95 = vpop.permute.xlu0 %94
    %96 = vrot.lane.b32.xlu0 %v88, 127
    %v97 = vpop.permute.xlu0 %96
    %98 = vrot.lane.b32.xlu0 %v83, 127
    %v99 = vpop.permute.xlu0 %98
    %100 = vrot.lane.b32.xlu0 %v89, 127
    %v101 = vpop.permute.xlu0 %100
    %vm102 = vcmask 1039360
    %v103 = vsel %vm102, %v91, %v93
    %v104 = vsel %vm102, %v93, %v95
    %v105 = vsel %vm102, %v95, %v97
    %v106 = vsel %vm102, %v97, %v99
    %v107 = vsel %vm102, %v99, %v101
    %113 = vst [vmem:[#allocation2 + $0x28] sm:$0xf] %v103
    %114 = vst [vmem:[#allocation2 + $0x30] sm:$0xf] %v104
    %115 = vst [vmem:[#allocation2 + $0x38] sm:$0xf] %v105
    %116 = vst [vmem:[#allocation2 + $0x40] sm:$0xf] %v106
    %117 = vst [vmem:[#allocation2 + $0x48] sm:$0xf] %v107
    %v118 = vld [vmem:[%s0] sm:$0xff]
    %v119 = vld [vmem:[%s0 + $0x8] sm:$0xff]
    %v120 = vld [vmem:[%s0 + $0x10] sm:$0xff]
    %v124 = vcombine.high %v118, %v118
    %v125 = vcombine.high %v119, %v119
    %v126 = vcombine.high %v120, %v120
    %127 = vrot.lane.b32.xlu0 %v118, 126
    %v128 = vpop.permute.xlu0 %127
    %129 = vrot.lane.b32.xlu0 %v124, 126
    %v130 = vpop.permute.xlu0 %129
    %131 = vrot.lane.b32.xlu0 %v119, 126
    %v132 = vpop.permute.xlu0 %131
    %133 = vrot.lane.b32.xlu0 %v125, 126
    %v134 = vpop.permute.xlu0 %133
    %135 = vrot.lane.b32.xlu0 %v120, 126
    %v136 = vpop.permute.xlu0 %135
    %137 = vrot.lane.b32.xlu0 %v126, 126
    %v138 = vpop.permute.xlu0 %137
    %vm139 = vcmask 1031168
    %v140 = vsel %vm139, %v128, %v130
    %v141 = vsel %vm139, %v130, %v132
    %v142 = vsel %vm139, %v132, %v134
    %v143 = vsel %vm139, %v134, %v136
    %v144 = vsel %vm139, %v136, %v138
    %150 = vst [vmem:[#allocation2 + $0x50] sm:$0xf] %v140
    %151 = vst [vmem:[#allocation2 + $0x58] sm:$0xf] %v141
    %152 = vst [vmem:[#allocation2 + $0x60] sm:$0xf] %v142
    %153 = vst [vmem:[#allocation2 + $0x68] sm:$0xf] %v143
    %154 = vst [vmem:[#allocation2 + $0x70] sm:$0xf] %v144
    %v155 = vld [vmem:[%s0] sm:$0xff]
    %v156 = vld [vmem:[%s0 + $0x8] sm:$0xff]
    %v157 = vld [vmem:[%s0 + $0x10] sm:$0xff]
    %v161 = vcombine.high %v155, %v155
    %v162 = vcombine.high %v156, %v156
    %v163 = vcombine.high %v157, %v157
    %164 = vrot.lane.b32.xlu0 %v155, 110
    %v165 = vpop.permute.xlu0 %164
    %166 = vrot.lane.b32.xlu0 %v161, 110
    %v167 = vpop.permute.xlu0 %166
    %168 = vrot.lane.b32.xlu0 %v156, 110
    %v169 = vpop.permute.xlu0 %168
    %170 = vrot.lane.b32.xlu0 %v162, 110
    %v171 = vpop.permute.xlu0 %170
    %172 = vrot.lane.b32.xlu0 %v157, 110
    %v173 = vpop.permute.xlu0 %172
    %174 = vrot.lane.b32.xlu0 %v163, 110
    %v175 = vpop.permute.xlu0 %174
    %vm176 = vcmask 900096
    %v177 = vsel %vm176, %v165, %v167
    %v178 = vsel %vm176, %v167, %v169
    %v179 = vsel %vm176, %v169, %v171
    %v180 = vsel %vm176, %v171, %v173
    %v181 = vsel %vm176, %v173, %v175
    %187 = vst [vmem:[#allocation2 + $0x78] sm:$0xf] %v177
    %188 = vst [vmem:[#allocation2 + $0x80] sm:$0xf] %v178
    %189 = vst [vmem:[#allocation2 + $0x88] sm:$0xf] %v179
    %190 = vst [vmem:[#allocation2 + $0x90] sm:$0xf] %v180
    %191 = vst [vmem:[#allocation2 + $0x98] sm:$0xf] %v181
    %v192 = vld [vmem:[%s0] sm:$0xff]
    %v193 = vld [vmem:[%s0 + $0x8] sm:$0xff]
    %v194 = vld [vmem:[%s0 + $0x10] sm:$0xff]
    %v198 = vcombine.high %v192, %v192
    %v199 = vcombine.high %v193, %v193
    %v200 = vcombine.high %v194, %v194
    %201 = vrot.lane.b32.xlu0 %v192, 109
    %v202 = vpop.permute.xlu0 %201
    %203 = vrot.lane.b32.xlu0 %v198, 109
    %v204 = vpop.permute.xlu0 %203
    %205 = vrot.lane.b32.xlu0 %v193, 109
    %v206 = vpop.permute.xlu0 %205
    %207 = vrot.lane.b32.xlu0 %v199, 109
    %v208 = vpop.permute.xlu0 %207
    %209 = vrot.lane.b32.xlu0 %v194, 109
    %v210 = vpop.permute.xlu0 %209
    %211 = vrot.lane.b32.xlu0 %v200, 109
    %v212 = vpop.permute.xlu0 %211
    %vm213 = vcmask 891904
    %v214 = vsel %vm213, %v202, %v204
    %v215 = vsel %vm213, %v204, %v206
    %v216 = vsel %vm213, %v206, %v208
    %v217 = vsel %vm213, %v208, %v210
    %v218 = vsel %vm213, %v210, %v212
    %224 = vst [vmem:[#allocation2 + $0xa0] sm:$0xf] %v214
    %225 = vst [vmem:[#allocation2 + $0xa8] sm:$0xf] %v215
    %226 = vst [vmem:[#allocation2 + $0xb0] sm:$0xf] %v216
    %227 = vst [vmem:[#allocation2 + $0xb8] sm:$0xf] %v217
    %228 = vst [vmem:[#allocation2 + $0xc0] sm:$0xf] %v218
    %v229 = vld [vmem:[%s0] sm:$0xff]
    %v230 = vld [vmem:[%s0 + $0x8] sm:$0xff]
    %v231 = vld [vmem:[%s0 + $0x10] sm:$0xff]
    %v235 = vcombine.high %v229, %v229
    %v236 = vcombine.high %v230, %v230
    %v237 = vcombine.high %v231, %v231
    %238 = vrot.lane.b32.xlu0 %v229, 108
    %v239 = vpop.permute.xlu0 %238
    %240 = vrot.lane.b32.xlu0 %v235, 108
    %v241 = vpop.permute.xlu0 %240
    %242 = vrot.lane.b32.xlu0 %v230, 108
    %v243 = vpop.permute.xlu0 %242
    %244 = vrot.lane.b32.xlu0 %v236, 108
    %v245 = vpop.permute.xlu0 %244
    %246 = vrot.lane.b32.xlu0 %v231, 108
    %v247 = vpop.permute.xlu0 %246
    %248 = vrot.lane.b32.xlu0 %v237, 108
    %v249 = vpop.permute.xlu0 %248
    %vm250 = vcmask 883712
    %v251 = vsel %vm250, %v239, %v241
    %v252 = vsel %vm250, %v241, %v243
    %v253 = vsel %vm250, %v243, %v245
    %v254 = vsel %vm250, %v245, %v247
    %v255 = vsel %vm250, %v247, %v249
    %261 = vst [vmem:[#allocation2 + $0xc8] sm:$0xf] %v251
    %262 = vst [vmem:[#allocation2 + $0xd0] sm:$0xf] %v252
    %263 = vst [vmem:[#allocation2 + $0xd8] sm:$0xf] %v253
    %264 = vst [vmem:[#allocation2 + $0xe0] sm:$0xf] %v254
    %265 = vst [vmem:[#allocation2 + $0xe8] sm:$0xf] %v255
    %v266 = vld [vmem:[%s0] sm:$0xff]
    %v267 = vld [vmem:[%s0 + $0x8] sm:$0xff]
    %v268 = vld [vmem:[%s0 + $0x10] sm:$0xff]
    %v272 = vcombine.high %v266, %v266
    %v273 = vcombine.high %v267, %v267
    %v274 = vcombine.high %v268, %v268
    %275 = vrot.lane.b32.xlu0 %v266, 92
    %v276 = vpop.permute.xlu0 %275
    %277 = vrot.lane.b32.xlu0 %v272, 92
    %v278 = vpop.permute.xlu0 %277
    %279 = vrot.lane.b32.xlu0 %v267, 92
    %v280 = vpop.permute.xlu0 %279
    %281 = vrot.lane.b32.xlu0 %v273, 92
    %v282 = vpop.permute.xlu0 %281
    %283 = vrot.lane.b32.xlu0 %v268, 92
    %v284 = vpop.permute.xlu0 %283
    %285 = vrot.lane.b32.xlu0 %v274, 92
    %v286 = vpop.permute.xlu0 %285
    %vm287 = vcmask 752640
    %v288 = vsel %vm287, %v276, %v278
    %v289 = vsel %vm287, %v278, %v280
    %v290 = vsel %vm287, %v280, %v282
    %v291 = vsel %vm287, %v282, %v284
    %v292 = vsel %vm287, %v284, %v286
    %298 = vst [vmem:[#allocation2 + $0xf0] sm:$0xf] %v288
    %299 = vst [vmem:[#allocation2 + $0xf8] sm:$0xf] %v289
    %300 = vst [vmem:[#allocation2 + $0x100] sm:$0xf] %v290
    %301 = vst [vmem:[#allocation2 + $0x108] sm:$0xf] %v291
    %302 = vst [vmem:[#allocation2 + $0x110] sm:$0xf] %v292
    %v303 = vld [vmem:[%s0] sm:$0xff]
    %v304 = vld [vmem:[%s0 + $0x8] sm:$0xff]
    %v305 = vld [vmem:[%s0 + $0x10] sm:$0xff]
    %v309 = vcombine.high %v303, %v303
    %v310 = vcombine.high %v304, %v304
    %v311 = vcombine.high %v305, %v305
    %312 = vrot.lane.b32.xlu0 %v303, 91
    %v313 = vpop.permute.xlu0 %312
    %314 = vrot.lane.b32.xlu0 %v309, 91
    %v315 = vpop.permute.xlu0 %314
    %316 = vrot.lane.b32.xlu0 %v304, 91
    %v317 = vpop.permute.xlu0 %316
    %318 = vrot.lane.b32.xlu0 %v310, 91
    %v319 = vpop.permute.xlu0 %318
    %320 = vrot.lane.b32.xlu0 %v305, 91
    %v321 = vpop.permute.xlu0 %320
    %322 = vrot.lane.b32.xlu0 %v311, 91
    %v323 = vpop.permute.xlu0 %322
    %vm324 = vcmask 744448
    %v325 = vsel %vm324, %v313, %v315
    %v326 = vsel %vm324, %v315, %v317
    %v327 = vsel %vm324, %v317, %v319
    %v328 = vsel %vm324, %v319, %v321
    %v329 = vsel %vm324, %v321, %v323
    %335 = vst [vmem:[#allocation2 + $0x118] sm:$0xf] %v325
    %336 = vst [vmem:[#allocation2 + $0x120] sm:$0xf] %v326
    %337 = vst [vmem:[#allocation2 + $0x128] sm:$0xf] %v327
    %338 = vst [vmem:[#allocation2 + $0x130] sm:$0xf] %v328
    %339 = vst [vmem:[#allocation2 + $0x138] sm:$0xf] %v329
    %v340 = vld [vmem:[%s0] sm:$0xff]
    %v341 = vld [vmem:[%s0 + $0x8] sm:$0xff]
    %v342 = vld [vmem:[%s0 + $0x10] sm:$0xff]
    %v346 = vcombine.high %v340, %v340
    %v347 = vcombine.high %v341, %v341
    %v348 = vcombine.high %v342, %v342
    %349 = vrot.lane.b32.xlu0 %v340, 90
    %v350 = vpop.permute.xlu0 %349
    %351 = vrot.lane.b32.xlu0 %v346, 90
    %v352 = vpop.permute.xlu0 %351
    %353 = vrot.lane.b32.xlu0 %v341, 90
    %v354 = vpop.permute.xlu0 %353
    %355 = vrot.lane.b32.xlu0 %v347, 90
    %v356 = vpop.permute.xlu0 %355
    %357 = vrot.lane.b32.xlu0 %v342, 90
    %v358 = vpop.permute.xlu0 %357
    %359 = vrot.lane.b32.xlu0 %v348, 90
    %v360 = vpop.permute.xlu0 %359
    %vm361 = vcmask 736256
    %v362 = vsel %vm361, %v350, %v352
    %v363 = vsel %vm361, %v352, %v354
    %v364 = vsel %vm361, %v354, %v356
    %v365 = vsel %vm361, %v356, %v358
    %v366 = vsel %vm361, %v358, %v360
    %372 = vst [vmem:[#allocation2 + $0x140] sm:$0xf] %v362
    %373 = vst [vmem:[#allocation2 + $0x148] sm:$0xf] %v363
    %374 = vst [vmem:[#allocation2 + $0x150] sm:$0xf] %v364
    %375 = vst [vmem:[#allocation2 + $0x158] sm:$0xf] %v365
    %376 = vst [vmem:[#allocation2 + $0x160] sm:$0xf] %v366
    %v377 = vld [vmem:[%s1] sm:$0xff]
    %v378 = vld [vmem:[%s1 + $0x8] sm:$0xff]
    %v379 = vld [vmem:[%s1 + $0x10] sm:$0xff]
    %v380 = vld [vmem:[%s1 + $0x18] sm:$0xff]
    %v381 = vld [vmem:[%s1 + $0x20] sm:$0x1]
    %v382 = vld [vmem:[#allocation2] sm:$0xff]
    %v383 = vld [vmem:[#allocation2 + $0x8] sm:$0xff]
    %v384 = vld [vmem:[#allocation2 + $0x10] sm:$0xff]
    %v385 = vld [vmem:[#allocation2 + $0x18] sm:$0xff]
    %v386 = vld [vmem:[#allocation2 + $0x20] sm:$0xff]
    %v387 = vld [vmem:[#allocation2 + $0x28] sm:$0xff]
    %v388 = vld [vmem:[#allocation2 + $0x30] sm:$0xff]
    %v389 = vld [vmem:[#allocation2 + $0x38] sm:$0xff]
    %v390 = vld [vmem:[#allocation2 + $0x40] sm:$0xff]
    %v391 = vld [vmem:[#allocation2 + $0x48] sm:$0xff]
    %v392 = vld [vmem:[#allocation2 + $0x50] sm:$0xff]
    %v393 = vld [vmem:[#allocation2 + $0x58] sm:$0xff]
    %v394 = vld [vmem:[#allocation2 + $0x60] sm:$0xff]
    %v395 = vld [vmem:[#allocation2 + $0x68] sm:$0xff]
    %v396 = vld [vmem:[#allocation2 + $0x70] sm:$0xff]
    %v397 = vld [vmem:[#allocation2 + $0x78] sm:$0xff]
    %v398 = vld [vmem:[#allocation2 + $0x80] sm:$0xff]
    %v399 = vld [vmem:[#allocation2 + $0x88] sm:$0xff]
    %v400 = vld [vmem:[#allocation2 + $0x90] sm:$0xff]
    %v401 = vld [vmem:[#allocation2 + $0x98] sm:$0xff]
    %v402 = vld [vmem:[#allocation2 + $0xa0] sm:$0xff]
    %v403 = vld [vmem:[#allocation2 + $0xa8] sm:$0xff]
    %v404 = vld [vmem:[#allocation2 + $0xb0] sm:$0xff]
    %v405 = vld [vmem:[#allocation2 + $0xb8] sm:$0xff]
    %v406 = vld [vmem:[#allocation2 + $0xc0] sm:$0xff]
    %v407 = vld [vmem:[#allocation2 + $0xc8] sm:$0xff]
    %v408 = vld [vmem:[#allocation2 + $0xd0] sm:$0xff]
    %v409 = vld [vmem:[#allocation2 + $0xd8] sm:$0xff]
    %v410 = vld [vmem:[#allocation2 + $0xe0] sm:$0xff]
    %v411 = vld [vmem:[#allocation2 + $0xe8] sm:$0xff]
    %v412 = vld [vmem:[#allocation2 + $0xf0] sm:$0xff]
    %v413 = vld [vmem:[#allocation2 + $0xf8] sm:$0xff]
    %v414 = vld [vmem:[#allocation2 + $0x100] sm:$0xff]
    %v415 = vld [vmem:[#allocation2 + $0x108] sm:$0xff]
    %v416 = vld [vmem:[#allocation2 + $0x110] sm:$0xff]
    %v417 = vld [vmem:[#allocation2 + $0x118] sm:$0xff]
    %v418 = vld [vmem:[#allocation2 + $0x120] sm:$0xff]
    %v419 = vld [vmem:[#allocation2 + $0x128] sm:$0xff]
    %v420 = vld [vmem:[#allocation2 + $0x130] sm:$0xff]
    %v421 = vld [vmem:[#allocation2 + $0x138] sm:$0xff]
    %v422 = vld [vmem:[#allocation2 + $0x140] sm:$0xff]
    %v423 = vld [vmem:[#allocation2 + $0x148] sm:$0xff]
    %v424 = vld [vmem:[#allocation2 + $0x150] sm:$0xff]
    %v425 = vld [vmem:[#allocation2 + $0x158] sm:$0xff]
    %v426 = vld [vmem:[#allocation2 + $0x160] sm:$0xff]
    %vm427 = vcmask 588800
    %v429 = vsel %vm427, %v377, 0
    %v432 = vsel %vm427, %v378, 0
    %v435 = vsel %vm427, %v379, 0
    %v438 = vsel %vm427, %v380, 0
    %v441 = vsel %vm427, %v381, 0
    %443 = vmatprep.subr.mxu0 %v383
    %444 = vmatpush1.msra.mxu0 %v382
    %445 = vmatprep.subr.mxu0 %v388
    %446 = vmatpush1.msra.mxu0 %v387
    %447 = vmatprep.subr.mxu0 %v393
    %448 = vmatpush1.msra.mxu0 %v392
    %449 = vmatprep.subr.mxu0 %v398
    %450 = vmatpush1.msra.mxu0 %v397
    %451 = vmatprep.subr.mxu0 %v403
    %452 = vmatpush1.msra.mxu0 %v402
    %453 = vmatprep.subr.mxu0 %v408
    %454 = vmatpush1.msra.mxu0 %v407
    %455 = vmatprep.subr.mxu0 %v413
    %456 = vmatpush1.msra.mxu0 %v412
    %457 = vmatprep.subr.mxu0 %v418
    %458 = vmatpush1.msra.mxu0 %v417
    %459 = vmatprep.subr.mxu0 %v423
    %460 = vmatpush1.msra.mxu0 %v422
    %461 = vmatprep.subr.mxu0 0.0
    %462 = vmatpush1.msra.mxu0 0.0
    %463 = vmatprep.subr.mxu0 0.0
    %464 = vmatpush1.msra.mxu0 0.0
    %465 = vmatprep.subr.mxu0 0.0
    %466 = vmatpush1.msra.mxu0 0.0
    %467 = vmatprep.subr.mxu0 0.0
    %468 = vmatpush1.msra.mxu0 0.0
    %469 = vmatprep.subr.mxu0 0.0
    %470 = vmatpush1.msra.mxu0 0.0
    %471 = vmatprep.subr.mxu0 0.0
    %472 = vmatpush1.msra.mxu0 0.0
    %473 = vmatprep.subr.mxu0 0.0
    %474 = vmatpush1.msra.mxu0 0.0
    %475 = vmatprep.subr.mxu0 0.0
    %476 = vmatpush1.msra.mxu0 0.0
    %477 = vmatprep.subr.mxu0 0.0
    %478 = vmatpush1.msra.mxu0 0.0
    %479 = vmatprep.subr.mxu0 0.0
    %480 = vmatpush1.msra.mxu0 0.0
    %481 = vmatprep.subr.mxu0 0.0
    %482 = vmatpush1.msra.mxu0 0.0
    %483 = vmatprep.subr.mxu0 0.0
    %484 = vmatpush1.msra.mxu0 0.0
    %485 = vmatprep.subr.mxu0 0.0
    %486 = vmatpush1.msra.mxu0 0.0
    %487 = vmatprep.subr.mxu0 0.0
    %488 = vmatpush1.msra.mxu0 0.0
    %489 = vmatprep.subr.mxu0 0.0
    %490 = vmatpush1.msra.mxu0 0.0
    %491 = vmatprep.subr.mxu0 0.0
    %492 = vmatpush1.msra.mxu0 0.0
    %493 = vmatprep.subr.mxu0 0.0
    %494 = vmatpush1.msra.mxu0 0.0
    %495 = vmatprep.subr.mxu0 0.0
    %496 = vmatpush1.msra.mxu0 0.0
    %497 = vmatprep.subr.mxu0 0.0
    %498 = vmatpush1.msra.mxu0 0.0
    %499 = vmatprep.subr.mxu0 0.0
    %500 = vmatpush1.msra.mxu0 0.0
    %501 = vmatprep.subr.mxu0 0.0
    %502 = vmatpush1.msra.mxu0 0.0
    %503 = vmatprep.subr.mxu0 0.0
    %504 = vmatpush1.msra.mxu0 0.0
    %505 = vmatprep.subr.mxu0 0.0
    %506 = vmatpush1.msra.mxu0 0.0
    %507 = vmatprep.mubr.f32.mxu0 0.0
    %508 = vmatmul.mubr.f32.gmra.mrb[0].mxu0 %v429
    %v509 = vpop.f32.mrb[0].mxu0
    %v510 = vadd.f32 0.0, %v509
    %v511 = vpop.f32.mrb[0].mxu0
    %v512 = vadd.f32 0.0, %v511
    %513 = vmatprep.mubr.f32.mxu0 0.0
    %514 = vmatmul.mubr.f32.gmra.mrb[0].mxu0 %v432
    %v515 = vpop.f32.mrb[0].mxu0
    %v516 = vadd.f32 0.0, %v515
    %v517 = vpop.f32.mrb[0].mxu0
    %v518 = vadd.f32 0.0, %v517
    %519 = vmatprep.mubr.f32.mxu0 0.0
    %520 = vmatmul.mubr.f32.gmra.mrb[0].mxu0 %v435
    %v521 = vpop.f32.mrb[0].mxu0
    %v522 = vadd.f32 0.0, %v521
    %v523 = vpop.f32.mrb[0].mxu0
    %v524 = vadd.f32 0.0, %v523
    %525 = vmatprep.mubr.f32.mxu0 0.0
    %526 = vmatmul.mubr.f32.gmra.mrb[0].mxu0 %v438
    %v527 = vpop.f32.mrb[0].mxu0
    %v528 = vadd.f32 0.0, %v527
    %v529 = vpop.f32.mrb[0].mxu0
    %v530 = vadd.f32 0.0, %v529
    %531 = vmatprep.mubr.f32.mxu0 0.0
    %532 = vmatmul.mubr.f32.gmra.mrb[0].mxu0 %v441
    %v533 = vpop.f32.mrb[0].mxu0
    %v534 = vadd.f32 0.0, %v533
    %v535 = vpop.f32.mrb[0].mxu0
    %v536 = vadd.f32 0.0, %v535
    %537 = vdwg.mxu0
    %538 = vmatprep.subr.mxu0 %v385
    %539 = vmatpush1.msra.mxu0 %v384
    %540 = vmatprep.subr.mxu0 %v390
    %541 = vmatpush1.msra.mxu0 %v389
    %542 = vmatprep.subr.mxu0 %v395
    %543 = vmatpush1.msra.mxu0 %v394
    %544 = vmatprep.subr.mxu0 %v400
    %545 = vmatpush1.msra.mxu0 %v399
    %546 = vmatprep.subr.mxu0 %v405
    %547 = vmatpush1.msra.mxu0 %v404
    %548 = vmatprep.subr.mxu0 %v410
    %549 = vmatpush1.msra.mxu0 %v409
    %550 = vmatprep.subr.mxu0 %v415
    %551 = vmatpush1.msra.mxu0 %v414
    %552 = vmatprep.subr.mxu0 %v420
    %553 = vmatpush1.msra.mxu0 %v419
    %554 = vmatprep.subr.mxu0 %v425
    %555 = vmatpush1.msra.mxu0 %v424
    %556 = vmatprep.subr.mxu0 0.0
    %557 = vmatpush1.msra.mxu0 0.0
    %558 = vmatprep.subr.mxu0 0.0
    %559 = vmatpush1.msra.mxu0 0.0
    %560 = vmatprep.subr.mxu0 0.0
    %561 = vmatpush1.msra.mxu0 0.0
    %562 = vmatprep.subr.mxu0 0.0
    %563 = vmatpush1.msra.mxu0 0.0
    %564 = vmatprep.subr.mxu0 0.0
    %565 = vmatpush1.msra.mxu0 0.0
    %566 = vmatprep.subr.mxu0 0.0
    %567 = vmatpush1.msra.mxu0 0.0
    %568 = vmatprep.subr.mxu0 0.0
    %569 = vmatpush1.msra.mxu0 0.0
    %570 = vmatprep.subr.mxu0 0.0
    %571 = vmatpush1.msra.mxu0 0.0
    %572 = vmatprep.subr.mxu0 0.0
    %573 = vmatpush1.msra.mxu0 0.0
    %574 = vmatprep.subr.mxu0 0.0
    %575 = vmatpush1.msra.mxu0 0.0
    %576 = vmatprep.subr.mxu0 0.0
    %577 = vmatpush1.msra.mxu0 0.0
    %578 = vmatprep.subr.mxu0 0.0
    %579 = vmatpush1.msra.mxu0 0.0
    %580 = vmatprep.subr.mxu0 0.0
    %581 = vmatpush1.msra.mxu0 0.0
    %582 = vmatprep.subr.mxu0 0.0
    %583 = vmatpush1.msra.mxu0 0.0
    %584 = vmatprep.subr.mxu0 0.0
    %585 = vmatpush1.msra.mxu0 0.0
    %586 = vmatprep.subr.mxu0 0.0
    %587 = vmatpush1.msra.mxu0 0.0
    %588 = vmatprep.subr.mxu0 0.0
    %589 = vmatpush1.msra.mxu0 0.0
    %590 = vmatprep.subr.mxu0 0.0
    %591 = vmatpush1.msra.mxu0 0.0
    %592 = vmatprep.subr.mxu0 0.0
    %593 = vmatpush1.msra.mxu0 0.0
    %594 = vmatprep.subr.mxu0 0.0
    %595 = vmatpush1.msra.mxu0 0.0
    %596 = vmatprep.subr.mxu0 0.0
    %597 = vmatpush1.msra.mxu0 0.0
    %598 = vmatprep.subr.mxu0 0.0
    %599 = vmatpush1.msra.mxu0 0.0
    %600 = vmatprep.subr.mxu0 0.0
    %601 = vmatpush1.msra.mxu0 0.0
    %602 = vmatprep.mubr.f32.mxu0 0.0
    %603 = vmatmul.mubr.f32.gmra.mrb[0].mxu0 %v429
    %v604 = vpop.f32.mrb[0].mxu0
    %v605 = vadd.f32 0.0, %v604
    %v606 = vpop.f32.mrb[0].mxu0
    %v607 = vadd.f32 0.0, %v606
    %608 = vmatprep.mubr.f32.mxu0 0.0
    %609 = vmatmul.mubr.f32.gmra.mrb[0].mxu0 %v432
    %v610 = vpop.f32.mrb[0].mxu0
    %v611 = vadd.f32 0.0, %v610
    %v612 = vpop.f32.mrb[0].mxu0
    %v613 = vadd.f32 0.0, %v612
    %614 = vmatprep.mubr.f32.mxu0 0.0
    %615 = vmatmul.mubr.f32.gmra.mrb[0].mxu0 %v435
    %v616 = vpop.f32.mrb[0].mxu0
    %v617 = vadd.f32 0.0, %v616
    %v618 = vpop.f32.mrb[0].mxu0
    %v619 = vadd.f32 0.0, %v618
    %620 = vmatprep.mubr.f32.mxu0 0.0
    %621 = vmatmul.mubr.f32.gmra.mrb[0].mxu0 %v438
    %v622 = vpop.f32.mrb[0].mxu0
    %v623 = vadd.f32 0.0, %v622
    %v624 = vpop.f32.mrb[0].mxu0
    %v625 = vadd.f32 0.0, %v624
    %626 = vmatprep.mubr.f32.mxu0 0.0
    %627 = vmatmul.mubr.f32.gmra.mrb[0].mxu0 %v441
    %v628 = vpop.f32.mrb[0].mxu0
    %v629 = vadd.f32 0.0, %v628
    %v630 = vpop.f32.mrb[0].mxu0
    %v631 = vadd.f32 0.0, %v630
    %632 = vdwg.mxu0
    %633 = vmatprep.subr.mxu0 0.0
    %634 = vmatpush1.msra.mxu0 %v386
    %635 = vmatprep.subr.mxu0 0.0
    %636 = vmatpush1.msra.mxu0 %v391
    %637 = vmatprep.subr.mxu0 0.0
    %638 = vmatpush1.msra.mxu0 %v396
    %639 = vmatprep.subr.mxu0 0.0
    %640 = vmatpush1.msra.mxu0 %v401
    %641 = vmatprep.subr.mxu0 0.0
    %642 = vmatpush1.msra.mxu0 %v406
    %643 = vmatprep.subr.mxu0 0.0
    %644 = vmatpush1.msra.mxu0 %v411
    %645 = vmatprep.subr.mxu0 0.0
    %646 = vmatpush1.msra.mxu0 %v416
    %647 = vmatprep.subr.mxu0 0.0
    %648 = vmatpush1.msra.mxu0 %v421
    %649 = vmatprep.subr.mxu0 0.0
    %650 = vmatpush1.msra.mxu0 %v426
    %651 = vmatprep.subr.mxu0 0.0
    %652 = vmatpush1.msra.mxu0 0.0
    %653 = vmatprep.subr.mxu0 0.0
    %654 = vmatpush1.msra.mxu0 0.0
    %655 = vmatprep.subr.mxu0 0.0
    %656 = vmatpush1.msra.mxu0 0.0
    %657 = vmatprep.subr.mxu0 0.0
    %658 = vmatpush1.msra.mxu0 0.0
    %659 = vmatprep.subr.mxu0 0.0
    %660 = vmatpush1.msra.mxu0 0.0
    %661 = vmatprep.subr.mxu0 0.0
    %662 = vmatpush1.msra.mxu0 0.0
    %663 = vmatprep.subr.mxu0 0.0
    %664 = vmatpush1.msra.mxu0 0.0
    %665 = vmatprep.subr.mxu0 0.0
    %666 = vmatpush1.msra.mxu0 0.0
    %667 = vmatprep.subr.mxu0 0.0
    %668 = vmatpush1.msra.mxu0 0.0
    %669 = vmatprep.subr.mxu0 0.0
    %670 = vmatpush1.msra.mxu0 0.0
    %671 = vmatprep.subr.mxu0 0.0
    %672 = vmatpush1.msra.mxu0 0.0
    %673 = vmatprep.subr.mxu0 0.0
    %674 = vmatpush1.msra.mxu0 0.0
    %675 = vmatprep.subr.mxu0 0.0
    %676 = vmatpush1.msra.mxu0 0.0
    %677 = vmatprep.subr.mxu0 0.0
    %678 = vmatpush1.msra.mxu0 0.0
    %679 = vmatprep.subr.mxu0 0.0
    %680 = vmatpush1.msra.mxu0 0.0
    %681 = vmatprep.subr.mxu0 0.0
    %682 = vmatpush1.msra.mxu0 0.0
    %683 = vmatprep.subr.mxu0 0.0
    %684 = vmatpush1.msra.mxu0 0.0
    %685 = vmatprep.subr.mxu0 0.0
    %686 = vmatpush1.msra.mxu0 0.0
    %687 = vmatprep.subr.mxu0 0.0
    %688 = vmatpush1.msra.mxu0 0.0
    %689 = vmatprep.subr.mxu0 0.0
    %690 = vmatpush1.msra.mxu0 0.0
    %691 = vmatprep.subr.mxu0 0.0
    %692 = vmatpush1.msra.mxu0 0.0
    %693 = vmatprep.subr.mxu0 0.0
    %694 = vmatpush1.msra.mxu0 0.0
    %695 = vmatprep.subr.mxu0 0.0
    %696 = vmatpush1.msra.mxu0 0.0
    %697 = vmatprep.mubr.f32.mxu0 0.0
    %698 = vmatmul.mubr.f32.gmra.mrb[0].mxu0 %v429
    %v699 = vpop.f32.mrb[0].mxu0
    %v700 = vadd.f32 0.0, %v699
    %v701 = vpop.f32.mrb[0].mxu0
    %702 = vmatprep.mubr.f32.mxu0 0.0
    %703 = vmatmul.mubr.f32.gmra.mrb[0].mxu0 %v432
    %v704 = vpop.f32.mrb[0].mxu0
    %v705 = vadd.f32 0.0, %v704
    %v706 = vpop.f32.mrb[0].mxu0
    %707 = vmatprep.mubr.f32.mxu0 0.0
    %708 = vmatmul.mubr.f32.gmra.mrb[0].mxu0 %v435
    %v709 = vpop.f32.mrb[0].mxu0
    %v710 = vadd.f32 0.0, %v709
    %v711 = vpop.f32.mrb[0].mxu0
    %712 = vmatprep.mubr.f32.mxu0 0.0
    %713 = vmatmul.mubr.f32.gmra.mrb[0].mxu0 %v438
    %v714 = vpop.f32.mrb[0].mxu0
    %v715 = vadd.f32 0.0, %v714
    %v716 = vpop.f32.mrb[0].mxu0
    %717 = vmatprep.mubr.f32.mxu0 0.0
    %718 = vmatmul.mubr.f32.gmra.mrb[0].mxu0 %v441
    %v719 = vpop.f32.mrb[0].mxu0
    %v720 = vadd.f32 0.0, %v719
    %v721 = vpop.f32.mrb[0].mxu0
    %722 = vdwg.mxu0
    %v723 = vmax.f32 %v510, 0.0
    %v724 = vmax.f32 %v512, 0.0
    %v725 = vmax.f32 %v605, 0.0
    %v726 = vmax.f32 %v607, 0.0
    %v727 = vmax.f32 %v700, 0.0
    %v728 = vmax.f32 %v516, 0.0
    %v729 = vmax.f32 %v518, 0.0
    %v730 = vmax.f32 %v611, 0.0
    %v731 = vmax.f32 %v613, 0.0
    %v732 = vmax.f32 %v705, 0.0
    %v733 = vmax.f32 %v522, 0.0
    %v734 = vmax.f32 %v524, 0.0
    %v735 = vmax.f32 %v617, 0.0
    %v736 = vmax.f32 %v619, 0.0
    %v737 = vmax.f32 %v710, 0.0
    %v738 = vmax.f32 %v528, 0.0
    %v739 = vmax.f32 %v530, 0.0
    %v740 = vmax.f32 %v623, 0.0
    %v741 = vmax.f32 %v625, 0.0
    %v742 = vmax.f32 %v715, 0.0
    %v743 = vmax.f32 %v534, 0.0
    %v744 = vmax.f32 %v536, 0.0
    %v745 = vmax.f32 %v629, 0.0
    %v746 = vmax.f32 %v631, 0.0
    %v747 = vmax.f32 %v720, 0.0
    %v748 = vld [vmem:[%s2] sm:$0xff]
    %v749 = vld [vmem:[%s2 + $0x8] sm:$0xff]
    %v750 = vld [vmem:[%s2 + $0x10] sm:$0xff]
    %v751 = vld [vmem:[%s2 + $0x18] sm:$0xff]
    %v752 = vld [vmem:[%s2 + $0x20] sm:$0xff]
    %v753 = vld [vmem:[%s2 + $0x28] sm:$0xff]
    %v754 = vld [vmem:[%s2 + $0x30] sm:$0xff]
    %v755 = vld [vmem:[%s2 + $0x38] sm:$0xff]
    %v756 = vld [vmem:[%s2 + $0x40] sm:$0xff]
    %v757 = vld [vmem:[%s2 + $0x48] sm:$0xff]
    %v758 = vld [vmem:[%s2 + $0x50] sm:$0xff]
    %v759 = vld [vmem:[%s2 + $0x58] sm:$0xff]
    %v760 = vld [vmem:[%s2 + $0x60] sm:$0xff]
    %v761 = vld [vmem:[%s2 + $0x68] sm:$0xff]
    %v762 = vld [vmem:[%s2 + $0x70] sm:$0xff]
    %v763 = vld [vmem:[%s2 + $0x78] sm:$0xff]
    %v764 = vld [vmem:[%s2 + $0x80] sm:$0xff]
    %v765 = vld [vmem:[%s2 + $0x88] sm:$0xff]
    %v766 = vld [vmem:[%s2 + $0x90] sm:$0xff]
    %v767 = vld [vmem:[%s2 + $0x98] sm:$0xff]
    %v768 = vld [vmem:[%s2 + $0xa0] sm:$0xff]
    %v769 = vld [vmem:[%s2 + $0xa8] sm:$0xff]
    %v770 = vld [vmem:[%s2 + $0xb0] sm:$0xff]
    %v771 = vld [vmem:[%s2 + $0xb8] sm:$0xff]
    %v772 = vld [vmem:[%s2 + $0xc0] sm:$0xff]
    %v773 = vld [vmem:[%s2 + $0xc8] sm:$0xff]
    %v774 = vld [vmem:[%s2 + $0xd0] sm:$0xff]
    %v775 = vld [vmem:[%s2 + $0xd8] sm:$0xff]
    %v776 = vld [vmem:[%s2 + $0xe0] sm:$0xff]
    %v777 = vld [vmem:[%s2 + $0xe8] sm:$0xff]
    %v778 = vld [vmem:[%s2 + $0xf0] sm:$0xff]
    %v779 = vld [vmem:[%s2 + $0xf8] sm:$0xff]
    %v780 = vld [vmem:[%s2 + $0x100] sm:$0xff]
    %v781 = vld [vmem:[%s2 + $0x108] sm:$0xff]
    %v782 = vld [vmem:[%s2 + $0x110] sm:$0xff]
    %v783 = vld [vmem:[%s2 + $0x118] sm:$0xff]
    %v784 = vld [vmem:[%s2 + $0x120] sm:$0xff]
    %v785 = vld [vmem:[%s2 + $0x128] sm:$0xff]
    %v786 = vld [vmem:[%s2 + $0x130] sm:$0xff]
    %v787 = vld [vmem:[%s2 + $0x138] sm:$0xff]
    %v788 = vld [vmem:[%s2 + $0x140] sm:$0xff]
    %v789 = vld [vmem:[%s2 + $0x148] sm:$0xff]
    %v790 = vld [vmem:[%s2 + $0x150] sm:$0xff]
    %v791 = vld [vmem:[%s2 + $0x158] sm:$0xff]
    %v792 = vld [vmem:[%s2 + $0x160] sm:$0xff]
    %v793 = vld [vmem:[%s2 + $0x168] sm:$0xff]
    %v794 = vld [vmem:[%s2 + $0x170] sm:$0xff]
    %v795 = vld [vmem:[%s2 + $0x178] sm:$0xff]
    %v796 = vld [vmem:[%s2 + $0x180] sm:$0xff]
    %v797 = vld [vmem:[%s2 + $0x188] sm:$0xff]
    %v798 = vld [vmem:[%s2 + $0x190] sm:$0xff]
    %v799 = vld [vmem:[%s2 + $0x198] sm:$0xff]
    %v800 = vld [vmem:[%s2 + $0x1a0] sm:$0xff]
    %v801 = vld [vmem:[%s2 + $0x1a8] sm:$0xff]
    %v802 = vld [vmem:[%s2 + $0x1b0] sm:$0xff]
    %v803 = vld [vmem:[%s2 + $0x1b8] sm:$0xff]
    %v804 = vld [vmem:[%s2 + $0x1c0] sm:$0xff]
    %v805 = vld [vmem:[%s2 + $0x1c8] sm:$0xff]
    %v806 = vld [vmem:[%s2 + $0x1d0] sm:$0xff]
    %v807 = vld [vmem:[%s2 + $0x1d8] sm:$0xff]
    %v808 = vld [vmem:[%s2 + $0x1e0] sm:$0xff]
    %v809 = vld [vmem:[%s2 + $0x1e8] sm:$0xff]
    %v810 = vld [vmem:[%s2 + $0x1f0] sm:$0xff]
    %v811 = vld [vmem:[%s2 + $0x1f8] sm:$0xff]
    %v812 = vld [vmem:[%s2 + $0x200] sm:$0xff]
    %v813 = vld [vmem:[%s2 + $0x208] sm:$0xff]
    %v814 = vld [vmem:[%s2 + $0x210] sm:$0xff]
    %v815 = vld [vmem:[%s2 + $0x218] sm:$0xff]
    %v816 = vld [vmem:[%s2 + $0x220] sm:$0xff]
    %v817 = vld [vmem:[%s2 + $0x228] sm:$0xff]
    %v818 = vld [vmem:[%s2 + $0x230] sm:$0xff]
    %v819 = vld [vmem:[%s2 + $0x238] sm:$0xff]
    %v820 = vld [vmem:[%s2 + $0x240] sm:$0xff]
    %v821 = vld [vmem:[%s2 + $0x248] sm:$0xff]
    %v822 = vld [vmem:[%s2 + $0x250] sm:$0xff]
    %v823 = vld [vmem:[%s2 + $0x258] sm:$0xff]
    %v824 = vld [vmem:[%s2 + $0x260] sm:$0xff]
    %v825 = vld [vmem:[%s2 + $0x268] sm:$0xff]
    %v826 = vld [vmem:[%s2 + $0x270] sm:$0xff]
    %v827 = vld [vmem:[%s2 + $0x278] sm:$0xff]
    %828 = vmatprep.subr.mxu0 0.0
    %829 = vmatpush1.msra.mxu0 %v748
    %830 = vmatprep.subr.mxu0 0.0
    %831 = vmatpush1.msra.mxu0 %v749
    %832 = vmatprep.subr.mxu0 0.0
    %833 = vmatpush1.msra.mxu0 %v750
    %834 = vmatprep.subr.mxu0 0.0
    %835 = vmatpush1.msra.mxu0 %v751
    %836 = vmatprep.subr.mxu0 0.0
    %837 = vmatpush1.msra.mxu0 %v752
    %838 = vmatprep.subr.mxu0 0.0
    %839 = vmatpush1.msra.mxu0 %v753
    %840 = vmatprep.subr.mxu0 0.0
    %841 = vmatpush1.msra.mxu0 %v754
    %842 = vmatprep.subr.mxu0 0.0
    %843 = vmatpush1.msra.mxu0 %v755
    %844 = vmatprep.subr.mxu0 0.0
    %845 = vmatpush1.msra.mxu0 %v756
    %846 = vmatprep.subr.mxu0 0.0
    %847 = vmatpush1.msra.mxu0 %v757
    %848 = vmatprep.subr.mxu0 0.0
    %849 = vmatpush1.msra.mxu0 %v758
    %850 = vmatprep.subr.mxu0 0.0
    %851 = vmatpush1.msra.mxu0 %v759
    %852 = vmatprep.subr.mxu0 0.0
    %853 = vmatpush1.msra.mxu0 %v760
    %854 = vmatprep.subr.mxu0 0.0
    %855 = vmatpush1.msra.mxu0 %v761
    %856 = vmatprep.subr.mxu0 0.0
    %857 = vmatpush1.msra.mxu0 %v762
    %858 = vmatprep.subr.mxu0 0.0
    %859 = vmatpush1.msra.mxu0 %v763
    %860 = vmatprep.subr.mxu0 0.0
    %861 = vmatpush1.msra.mxu0 %v764
    %862 = vmatprep.subr.mxu0 0.0
    %863 = vmatpush1.msra.mxu0 %v765
    %864 = vmatprep.subr.mxu0 0.0
    %865 = vmatpush1.msra.mxu0 %v766
    %866 = vmatprep.subr.mxu0 0.0
    %867 = vmatpush1.msra.mxu0 %v767
    %868 = vmatprep.subr.mxu0 0.0
    %869 = vmatpush1.msra.mxu0 %v768
    %870 = vmatprep.subr.mxu0 0.0
    %871 = vmatpush1.msra.mxu0 %v769
    %872 = vmatprep.subr.mxu0 0.0
    %873 = vmatpush1.msra.mxu0 %v770
    %874 = vmatprep.subr.mxu0 0.0
    %875 = vmatpush1.msra.mxu0 %v771
    %876 = vmatprep.subr.mxu0 0.0
    %877 = vmatpush1.msra.mxu0 %v772
    %878 = vmatprep.subr.mxu0 0.0
    %879 = vmatpush1.msra.mxu0 %v773
    %880 = vmatprep.subr.mxu0 0.0
    %881 = vmatpush1.msra.mxu0 %v774
    %882 = vmatprep.subr.mxu0 0.0
    %883 = vmatpush1.msra.mxu0 %v775
    %884 = vmatprep.subr.mxu0 0.0
    %885 = vmatpush1.msra.mxu0 %v776
    %886 = vmatprep.subr.mxu0 0.0
    %887 = vmatpush1.msra.mxu0 %v777
    %888 = vmatprep.subr.mxu0 0.0
    %889 = vmatpush1.msra.mxu0 %v778
    %890 = vmatprep.subr.mxu0 0.0
    %891 = vmatpush1.msra.mxu0 %v779
    %892 = vmatprep.mubr.f32.mxu0 %v724
    %893 = vmatmul.mubr.f32.gmra.mrb[0].mxu0 %v723
    %v894 = vpop.f32.mrb[0].mxu0
    %v895 = vadd.f32 0.0, %v894
    %v896 = vpop.f32.mrb[0].mxu0
    %897 = vmatprep.mubr.f32.mxu0 %v729
    %898 = vmatmul.mubr.f32.gmra.mrb[0].mxu0 %v728
    %v899 = vpop.f32.mrb[0].mxu0
    %v900 = vadd.f32 0.0, %v899
    %v901 = vpop.f32.mrb[0].mxu0
    %902 = vmatprep.mubr.f32.mxu0 %v734
    %903 = vmatmul.mubr.f32.gmra.mrb[0].mxu0 %v733
    %v904 = vpop.f32.mrb[0].mxu0
    %v905 = vadd.f32 0.0, %v904
    %v906 = vpop.f32.mrb[0].mxu0
    %907 = vmatprep.mubr.f32.mxu0 %v739
    %908 = vmatmul.mubr.f32.gmra.mrb[0].mxu0 %v738
    %v909 = vpop.f32.mrb[0].mxu0
    %v910 = vadd.f32 0.0, %v909
    %v911 = vpop.f32.mrb[0].mxu0
    %912 = vmatprep.mubr.f32.mxu0 %v744
    %913 = vmatmul.mubr.f32.gmra.mrb[0].mxu0 %v743
    %v914 = vpop.f32.mrb[0].mxu0
    %v915 = vadd.f32 0.0, %v914
    %v916 = vpop.f32.mrb[0].mxu0
    %917 = vdwg.mxu0
    %918 = vmatprep.subr.mxu0 0.0
    %919 = vmatpush1.msra.mxu0 %v780
    %920 = vmatprep.subr.mxu0 0.0
    %921 = vmatpush1.msra.mxu0 %v781
    %922 = vmatprep.subr.mxu0 0.0
    %923 = vmatpush1.msra.mxu0 %v782
    %924 = vmatprep.subr.mxu0 0.0
    %925 = vmatpush1.msra.mxu0 %v783
    %926 = vmatprep.subr.mxu0 0.0
    %927 = vmatpush1.msra.mxu0 %v784
    %928 = vmatprep.subr.mxu0 0.0
    %929 = vmatpush1.msra.mxu0 %v785
    %930 = vmatprep.subr.mxu0 0.0
    %931 = vmatpush1.msra.mxu0 %v786
    %932 = vmatprep.subr.mxu0 0.0
    %933 = vmatpush1.msra.mxu0 %v787
    %934 = vmatprep.subr.mxu0 0.0
    %935 = vmatpush1.msra.mxu0 %v788
    %936 = vmatprep.subr.mxu0 0.0
    %937 = vmatpush1.msra.mxu0 %v789
    %938 = vmatprep.subr.mxu0 0.0
    %939 = vmatpush1.msra.mxu0 %v790
    %940 = vmatprep.subr.mxu0 0.0
    %941 = vmatpush1.msra.mxu0 %v791
    %942 = vmatprep.subr.mxu0 0.0
    %943 = vmatpush1.msra.mxu0 %v792
    %944 = vmatprep.subr.mxu0 0.0
    %945 = vmatpush1.msra.mxu0 %v793
    %946 = vmatprep.subr.mxu0 0.0
    %947 = vmatpush1.msra.mxu0 %v794
    %948 = vmatprep.subr.mxu0 0.0
    %949 = vmatpush1.msra.mxu0 %v795
    %950 = vmatprep.subr.mxu0 0.0
    %951 = vmatpush1.msra.mxu0 %v796
    %952 = vmatprep.subr.mxu0 0.0
    %953 = vmatpush1.msra.mxu0 %v797
    %954 = vmatprep.subr.mxu0 0.0
    %955 = vmatpush1.msra.mxu0 %v798
    %956 = vmatprep.subr.mxu0 0.0
    %957 = vmatpush1.msra.mxu0 %v799
    %958 = vmatprep.subr.mxu0 0.0
    %959 = vmatpush1.msra.mxu0 %v800
    %960 = vmatprep.subr.mxu0 0.0
    %961 = vmatpush1.msra.mxu0 %v801
    %962 = vmatprep.subr.mxu0 0.0
    %963 = vmatpush1.msra.mxu0 %v802
    %964 = vmatprep.subr.mxu0 0.0
    %965 = vmatpush1.msra.mxu0 %v803
    %966 = vmatprep.subr.mxu0 0.0
    %967 = vmatpush1.msra.mxu0 %v804
    %968 = vmatprep.subr.mxu0 0.0
    %969 = vmatpush1.msra.mxu0 %v805
    %970 = vmatprep.subr.mxu0 0.0
    %971 = vmatpush1.msra.mxu0 %v806
    %972 = vmatprep.subr.mxu0 0.0
    %973 = vmatpush1.msra.mxu0 %v807
    %974 = vmatprep.subr.mxu0 0.0
    %975 = vmatpush1.msra.mxu0 %v808
    %976 = vmatprep.subr.mxu0 0.0
    %977 = vmatpush1.msra.mxu0 %v809
    %978 = vmatprep.subr.mxu0 0.0
    %979 = vmatpush1.msra.mxu0 %v810
    %980 = vmatprep.subr.mxu0 0.0
    %981 = vmatpush1.msra.mxu0 %v811
    %982 = vmatprep.mubr.f32.mxu0 %v726
    %983 = vmatmul.mubr.f32.gmra.mrb[0].mxu0 %v725
    %v984 = vpop.f32.mrb[0].mxu0
    %v985 = vadd.f32 %v895, %v984
    %v986 = vpop.f32.mrb[0].mxu0
    %987 = vmatprep.mubr.f32.mxu0 %v731
    %988 = vmatmul.mubr.f32.gmra.mrb[0].mxu0 %v730
    %v989 = vpop.f32.mrb[0].mxu0
    %v990 = vadd.f32 %v900, %v989
    %v991 = vpop.f32.mrb[0].mxu0
    %992 = vmatprep.mubr.f32.mxu0 %v736
    %993 = vmatmul.mubr.f32.gmra.mrb[0].mxu0 %v735
    %v994 = vpop.f32.mrb[0].mxu0
    %v995 = vadd.f32 %v905, %v994
    %v996 = vpop.f32.mrb[0].mxu0
    %997 = vmatprep.mubr.f32.mxu0 %v741
    %998 = vmatmul.mubr.f32.gmra.mrb[0].mxu0 %v740
    %v999 = vpop.f32.mrb[0].mxu0
    %v1000 = vadd.f32 %v910, %v999
    %v1001 = vpop.f32.mrb[0].mxu0
    %1002 = vmatprep.mubr.f32.mxu0 %v746
    %1003 = vmatmul.mubr.f32.gmra.mrb[0].mxu0 %v745
    %v1004 = vpop.f32.mrb[0].mxu0
    %v1005 = vadd.f32 %v915, %v1004
    %v1006 = vpop.f32.mrb[0].mxu0
    %1007 = vdwg.mxu0
    %1008 = vmatprep.subr.mxu0 0.0
    %1009 = vmatpush1.msra.mxu0 %v812
    %1010 = vmatprep.subr.mxu0 0.0
    %1011 = vmatpush1.msra.mxu0 %v813
    %1012 = vmatprep.subr.mxu0 0.0
    %1013 = vmatpush1.msra.mxu0 %v814
    %1014 = vmatprep.subr.mxu0 0.0
    %1015 = vmatpush1.msra.mxu0 %v815
    %1016 = vmatprep.subr.mxu0 0.0
    %1017 = vmatpush1.msra.mxu0 %v816
    %1018 = vmatprep.subr.mxu0 0.0
    %1019 = vmatpush1.msra.mxu0 %v817
    %1020 = vmatprep.subr.mxu0 0.0
    %1021 = vmatpush1.msra.mxu0 %v818
    %1022 = vmatprep.subr.mxu0 0.0
    %1023 = vmatpush1.msra.mxu0 %v819
    %1024 = vmatprep.subr.mxu0 0.0
    %1025 = vmatpush1.msra.mxu0 %v820
    %1026 = vmatprep.subr.mxu0 0.0
    %1027 = vmatpush1.msra.mxu0 %v821
    %1028 = vmatprep.subr.mxu0 0.0
    %1029 = vmatpush1.msra.mxu0 %v822
    %1030 = vmatprep.subr.mxu0 0.0
    %1031 = vmatpush1.msra.mxu0 %v823
    %1032 = vmatprep.subr.mxu0 0.0
    %1033 = vmatpush1.msra.mxu0 %v824
    %1034 = vmatprep.subr.mxu0 0.0
    %1035 = vmatpush1.msra.mxu0 %v825
    %1036 = vmatprep.subr.mxu0 0.0
    %1037 = vmatpush1.msra.mxu0 %v826
    %1038 = vmatprep.subr.mxu0 0.0
    %1039 = vmatpush1.msra.mxu0 %v827
    %1040 = vmatprep.subr.mxu0 0.0
    %1041 = vmatpush1.msra.mxu0 0.0
    %1042 = vmatprep.subr.mxu0 0.0
    %1043 = vmatpush1.msra.mxu0 0.0
    %1044 = vmatprep.subr.mxu0 0.0
    %1045 = vmatpush1.msra.mxu0 0.0
    %1046 = vmatprep.subr.mxu0 0.0
    %1047 = vmatpush1.msra.mxu0 0.0
    %1048 = vmatprep.subr.mxu0 0.0
    %1049 = vmatpush1.msra.mxu0 0.0
    %1050 = vmatprep.subr.mxu0 0.0
    %1051 = vmatpush1.msra.mxu0 0.0
    %1052 = vmatprep.subr.mxu0 0.0
    %1053 = vmatpush1.msra.mxu0 0.0
    %1054 = vmatprep.subr.mxu0 0.0
    %1055 = vmatpush1.msra.mxu0 0.0
    %1056 = vmatprep.subr.mxu0 0.0
    %1057 = vmatpush1.msra.mxu0 0.0
    %1058 = vmatprep.subr.mxu0 0.0
    %1059 = vmatpush1.msra.mxu0 0.0
    %1060 = vmatprep.subr.mxu0 0.0
    %1061 = vmatpush1.msra.mxu0 0.0
    %1062 = vmatprep.subr.mxu0 0.0
    %1063 = vmatpush1.msra.mxu0 0.0
    %1064 = vmatprep.subr.mxu0 0.0
    %1065 = vmatpush1.msra.mxu0 0.0
    %1066 = vmatprep.subr.mxu0 0.0
    %1067 = vmatpush1.msra.mxu0 0.0
    %1068 = vmatprep.subr.mxu0 0.0
    %1069 = vmatpush1.msra.mxu0 0.0
    %1070 = vmatprep.subr.mxu0 0.0
    %1071 = vmatpush1.msra.mxu0 0.0
    %1072 = vmatprep.mubr.f32.mxu0 0.0
    %1073 = vmatmul.mubr.f32.gmra.mrb[0].mxu0 %v727
    %v1074 = vpop.f32.mrb[0].mxu0
    %v1075 = vadd.f32 %v985, %v1074
    %v1076 = vpop.f32.mrb[0].mxu0
    %1077 = vmatprep.mubr.f32.mxu0 0.0
    %1078 = vmatmul.mubr.f32.gmra.mrb[0].mxu0 %v732
    %v1079 = vpop.f32.mrb[0].mxu0
    %v1080 = vadd.f32 %v990, %v1079
    %v1081 = vpop.f32.mrb[0].mxu0
    %1082 = vmatprep.mubr.f32.mxu0 0.0
    %1083 = vmatmul.mubr.f32.gmra.mrb[0].mxu0 %v737
    %v1084 = vpop.f32.mrb[0].mxu0
    %v1085 = vadd.f32 %v995, %v1084
    %v1086 = vpop.f32.mrb[0].mxu0
    %1087 = vmatprep.mubr.f32.mxu0 0.0
    %1088 = vmatmul.mubr.f32.gmra.mrb[0].mxu0 %v742
    %v1089 = vpop.f32.mrb[0].mxu0
    %v1090 = vadd.f32 %v1000, %v1089
    %v1091 = vpop.f32.mrb[0].mxu0
    %1092 = vmatprep.mubr.f32.mxu0 0.0
    %1093 = vmatmul.mubr.f32.gmra.mrb[0].mxu0 %v747
    %v1094 = vpop.f32.mrb[0].mxu0
    %v1095 = vadd.f32 %v1005, %v1094
    %v1096 = vpop.f32.mrb[0].mxu0
    %1097 = vdwg.mxu0
    %1098 = vxpose.xlu0.b32.start [1/16] %v1075, 128
    %1099 = vxpose.xlu0.b32.cont [2/16] %v1080, 128
    %1100 = vxpose.xlu0.b32.cont [3/16] %v1085, 128
    %1101 = vxpose.xlu0.b32.cont [4/16] %v1090, 128
    %1102 = vxpose.xlu0.b32.cont [5/16] %v1095, 128
    %1103 = vxpose.xlu0.b32.cont [6/16] 0.0, 128
    %1104 = vxpose.xlu0.b32.cont [7/16] 0.0, 128
    %1105 = vxpose.xlu0.b32.cont [8/16] 0.0, 128
    %1106 = vxpose.xlu0.b32.cont [9/16] 0.0, 128
    %1107 = vxpose.xlu0.b32.cont [10/16] 0.0, 128
    %1108 = vxpose.xlu0.b32.cont [11/16] 0.0, 128
    %1109 = vxpose.xlu0.b32.cont [12/16] 0.0, 128
    %1110 = vxpose.xlu0.b32.cont [13/16] 0.0, 128
    %1111 = vxpose.xlu0.b32.cont [14/16] 0.0, 128
    %1112 = vxpose.xlu0.b32.cont [15/16] 0.0, 128
    %1113 = vxpose.xlu0.b32.end [16/16] 0.0, 128
    %v1114 = vpop.trf.xlu0
    %v1115 = vpop.trf.xlu0
    %v1116 = vpop.trf.xlu0
    %v1117 = vpop.trf.xlu0
    %v1118 = vpop.trf.xlu0
    %v1119 = vpop.trf.xlu0
    %v1120 = vpop.trf.xlu0
    %v1121 = vpop.trf.xlu0
    %v1122 = vpop.trf.xlu0
    %v1123 = vpop.trf.xlu0
    %v1124 = vpop.trf.xlu0
    %v1125 = vpop.trf.xlu0
    %v1126 = vpop.trf.xlu0
    %v1127 = vpop.trf.xlu0
    %v1128 = vpop.trf.xlu0
    %v1129 = vpop.trf.xlu0
    %v1130 = vld [vmem:[%s1 + $0x28] sm:$0xff]
    %v1131 = vld [vmem:[%s1 + $0x30] sm:$0xff]
    %v1132 = vld [vmem:[%s1 + $0x38] sm:$0xff]
    %v1133 = vld [vmem:[%s1 + $0x40] sm:$0xff]
    %v1134 = vld [vmem:[%s1 + $0x48] sm:$0x1]
    %vm1135 = vcmask 269312
    %v1137 = vsel %vm1135, %v1114, 0
    %vm1139 = vcmask 1040384
    %v1141 = vsel %vm1139, %v1134, 0
    %1143 = vmatprep.subr.mxu0 0.0
    %1144 = vmatpush1.msra.mxu0 %v1130
    %1145 = vmatprep.subr.mxu0 0.0
    %1146 = vmatpush1.msra.mxu0 %v1131
    %1147 = vmatprep.subr.mxu0 0.0
    %1148 = vmatpush1.msra.mxu0 %v1132
    %1149 = vmatprep.subr.mxu0 0.0
    %1150 = vmatpush1.msra.mxu0 %v1133
    %1151 = vmatprep.subr.mxu0 0.0
    %1152 = vmatpush1.msra.mxu0 %v1141
    %1153 = vmatprep.subr.mxu0 0.0
    %1154 = vmatpush1.msra.mxu0 0.0
    %1155 = vmatprep.subr.mxu0 0.0
    %1156 = vmatpush1.msra.mxu0 0.0
    %1157 = vmatprep.subr.mxu0 0.0
    %1158 = vmatpush1.msra.mxu0 0.0
    %1159 = vmatprep.subr.mxu0 0.0
    %1160 = vmatpush1.msra.mxu0 0.0
    %1161 = vmatprep.subr.mxu0 0.0
    %1162 = vmatpush1.msra.mxu0 0.0
    %1163 = vmatprep.subr.mxu0 0.0
    %1164 = vmatpush1.msra.mxu0 0.0
    %1165 = vmatprep.subr.mxu0 0.0
    %1166 = vmatpush1.msra.mxu0 0.0
    %1167 = vmatprep.subr.mxu0 0.0
    %1168 = vmatpush1.msra.mxu0 0.0
    %1169 = vmatprep.subr.mxu0 0.0
    %1170 = vmatpush1.msra.mxu0 0.0
    %1171 = vmatprep.subr.mxu0 0.0
    %1172 = vmatpush1.msra.mxu0 0.0
    %1173 = vmatprep.subr.mxu0 0.0
    %1174 = vmatpush1.msra.mxu0 0.0
    %1175 = vmatprep.subr.mxu0 0.0
    %1176 = vmatpush1.msra.mxu0 0.0
    %1177 = vmatprep.subr.mxu0 0.0
    %1178 = vmatpush1.msra.mxu0 0.0
    %1179 = vmatprep.subr.mxu0 0.0
    %1180 = vmatpush1.msra.mxu0 0.0
    %1181 = vmatprep.subr.mxu0 0.0
    %1182 = vmatpush1.msra.mxu0 0.0
    %1183 = vmatprep.subr.mxu0 0.0
    %1184 = vmatpush1.msra.mxu0 0.0
    %1185 = vmatprep.subr.mxu0 0.0
    %1186 = vmatpush1.msra.mxu0 0.0
    %1187 = vmatprep.subr.mxu0 0.0
    %1188 = vmatpush1.msra.mxu0 0.0
    %1189 = vmatprep.subr.mxu0 0.0
    %1190 = vmatpush1.msra.mxu0 0.0
    %1191 = vmatprep.subr.mxu0 0.0
    %1192 = vmatpush1.msra.mxu0 0.0
    %1193 = vmatprep.subr.mxu0 0.0
    %1194 = vmatpush1.msra.mxu0 0.0
    %1195 = vmatprep.subr.mxu0 0.0
    %1196 = vmatpush1.msra.mxu0 0.0
    %1197 = vmatprep.subr.mxu0 0.0
    %1198 = vmatpush1.msra.mxu0 0.0
    %1199 = vmatprep.subr.mxu0 0.0
    %1200 = vmatpush1.msra.mxu0 0.0
    %1201 = vmatprep.subr.mxu0 0.0
    %1202 = vmatpush1.msra.mxu0 0.0
    %1203 = vmatprep.subr.mxu0 0.0
    %1204 = vmatpush1.msra.mxu0 0.0
    %1205 = vmatprep.subr.mxu0 0.0
    %1206 = vmatpush1.msra.mxu0 0.0
    %1207 = vmatprep.mubr.f32.mxu0 0.0
    %1208 = vmatmul.mubr.f32.gmra.mrb[0].mxu0 %v1137
    %v1209 = vpop.f32.mrb[0].mxu0
    %v1210 = vadd.f32 0.0, %v1209
    %v1211 = vpop.f32.mrb[0].mxu0
    %1212 = vdwg.mxu0
    %v1213 = vmax.f32 %v1210, 0.0
    %v1214 = vld [vmem:[%s1 + $0x50] sm:$0xff]
    %v1215 = vld [vmem:[%s1 + $0x58] sm:$0xff]
    %v1216 = vld [vmem:[%s1 + $0x60] sm:$0xff]
    %v1217 = vld [vmem:[%s1 + $0x68] sm:$0xff]
    %v1218 = vld [vmem:[%s1 + $0x70] sm:$0x1]
    %v1220 = vsel %vm1135, %v1213, 0
    %v1223 = vsel %vm1139, %v1218, 0
    %1225 = vmatprep.subr.mxu0 0.0
    %1226 = vmatpush1.msra.mxu0 %v1214
    %1227 = vmatprep.subr.mxu0 0.0
    %1228 = vmatpush1.msra.mxu0 %v1215
    %1229 = vmatprep.subr.mxu0 0.0
    %1230 = vmatpush1.msra.mxu0 %v1216
    %1231 = vmatprep.subr.mxu0 0.0
    %1232 = vmatpush1.msra.mxu0 %v1217
    %1233 = vmatprep.subr.mxu0 0.0
    %1234 = vmatpush1.msra.mxu0 %v1223
    %1235 = vmatprep.subr.mxu0 0.0
    %1236 = vmatpush1.msra.mxu0 0.0
    %1237 = vmatprep.subr.mxu0 0.0
    %1238 = vmatpush1.msra.mxu0 0.0
    %1239 = vmatprep.subr.mxu0 0.0
    %1240 = vmatpush1.msra.mxu0 0.0
    %1241 = vmatprep.subr.mxu0 0.0
    %1242 = vmatpush1.msra.mxu0 0.0
    %1243 = vmatprep.subr.mxu0 0.0
    %1244 = vmatpush1.msra.mxu0 0.0
    %1245 = vmatprep.subr.mxu0 0.0
    %1246 = vmatpush1.msra.mxu0 0.0
    %1247 = vmatprep.subr.mxu0 0.0
    %1248 = vmatpush1.msra.mxu0 0.0
    %1249 = vmatprep.subr.mxu0 0.0
    %1250 = vmatpush1.msra.mxu0 0.0
    %1251 = vmatprep.subr.mxu0 0.0
    %1252 = vmatpush1.msra.mxu0 0.0
    %1253 = vmatprep.subr.mxu0 0.0
    %1254 = vmatpush1.msra.mxu0 0.0
    %1255 = vmatprep.subr.mxu0 0.0
    %1256 = vmatpush1.msra.mxu0 0.0
    %1257 = vmatprep.subr.mxu0 0.0
    %1258 = vmatpush1.msra.mxu0 0.0
    %1259 = vmatprep.subr.mxu0 0.0
    %1260 = vmatpush1.msra.mxu0 0.0
    %1261 = vmatprep.subr.mxu0 0.0
    %1262 = vmatpush1.msra.mxu0 0.0
    %1263 = vmatprep.subr.mxu0 0.0
    %1264 = vmatpush1.msra.mxu0 0.0
    %1265 = vmatprep.subr.mxu0 0.0
    %1266 = vmatpush1.msra.mxu0 0.0
    %1267 = vmatprep.subr.mxu0 0.0
    %1268 = vmatpush1.msra.mxu0 0.0
    %1269 = vmatprep.subr.mxu0 0.0
    %1270 = vmatpush1.msra.mxu0 0.0
    %1271 = vmatprep.subr.mxu0 0.0
    %1272 = vmatpush1.msra.mxu0 0.0
    %1273 = vmatprep.subr.mxu0 0.0
    %1274 = vmatpush1.msra.mxu0 0.0
    %1275 = vmatprep.subr.mxu0 0.0
    %1276 = vmatpush1.msra.mxu0 0.0
    %1277 = vmatprep.subr.mxu0 0.0
    %1278 = vmatpush1.msra.mxu0 0.0
    %1279 = vmatprep.subr.mxu0 0.0
    %1280 = vmatpush1.msra.mxu0 0.0
    %1281 = vmatprep.subr.mxu0 0.0
    %1282 = vmatpush1.msra.mxu0 0.0
    %1283 = vmatprep.subr.mxu0 0.0
    %1284 = vmatpush1.msra.mxu0 0.0
    %1285 = vmatprep.subr.mxu0 0.0
    %1286 = vmatpush1.msra.mxu0 0.0
    %1287 = vmatprep.subr.mxu0 0.0
    %1288 = vmatpush1.msra.mxu0 0.0
    %1289 = vmatprep.mubr.f32.mxu0 0.0
    %1290 = vmatmul.mubr.f32.gmra.mrb[0].mxu0 %v1220
    %v1291 = vpop.f32.mrb[0].mxu0
    %v1292 = vadd.f32 0.0, %v1291
    %v1293 = vpop.f32.mrb[0].mxu0
    %1294 = vdwg.mxu0
    %1295 = vst [vmem:[#allocation3] sm:$0xff] %v1292
    // Predicated region
    $region14: #{_forward_slab.1} parent=1 // pred_check
      _
    $region15: #{_forward_slab.1} parent=1 // pred_check_branch
      %1297 = sbr.rel (0) target = $region17
    $region16: #{_forward_slab.1} parent=1 // pred_region
      %s1299 = ssub.s32 128, 128
      %1300 = vsyncadd [#allocation4], %s1299
      %s1302 = sshll.u32 [#allocation3], 4
      %s1303 = int_to_ptr.vmem [resolvable:$true] %s1302
      %1305 = dma.vmem_to_hbm [thread:$0]  %s1303, 128, %s3, [#allocation4]
    $region17: #{_forward_slab.1} parent=1 // pred_fallthru
      _
    // Predicated region
    $region18: #{_forward_slab.1} parent=1 // pred_check
      _
    $region19: #{_forward_slab.1} parent=1 // pred_check_branch
      %1307 = sbr.rel (0) target = $region21
    $region20: #{_forward_slab.1} parent=1 // pred_region
      %1308 = dma.done [#allocation4], 128
    $region21: #{_forward_slab.1} parent=1 // pred_fallthru
      _
    %1309 = vsyncpa [#allocation4], 1

</llo_original>
